<compile_context>
chip_gen: v5e
topology: v5e:2x2
jax: 0.10.0
libtpu: 0.0.40
codegen_flags: <defaults>
</compile_context>

<pallas_src>
import math
from functools import partial

import numpy as np
import jax
import jax.numpy as jnp
from jax.experimental import pallas as pl
from jax.experimental.pallas import tpu as pltpu


def _fitting_kernel(chunk_type_ref, chunk_valid_ref, x_ref,
                    w1_ref, b1_ref, w2_ref, b2_ref,
                    w3_ref, b3_ref, w4_ref, b4_ref,
                    o_ref, *, precision):
    # chunk_type_ref is consumed only by the weight/bias index_maps.
    c = pl.program_id(0)
    valid = chunk_valid_ref[c] != 0

    @pl.when(valid)
    def _():
        x = x_ref[...]                                        # (M, INp)
        # layer 1: Dense(activation=True)
        h = jnp.tanh(jnp.dot(x, w1_ref[...], precision=precision,
                             preferred_element_type=jnp.float32) + b1_ref[...])
        # layer 2: Dense(activation=True, residual=True)  (out == in -> plain add)
        h = jnp.tanh(jnp.dot(h, w2_ref[...], precision=precision,
                             preferred_element_type=jnp.float32) + b2_ref[...]) + h
        # layer 3: Dense(activation=True, residual=True)
        h = jnp.tanh(jnp.dot(h, w3_ref[...], precision=precision,
                             preferred_element_type=jnp.float32) + b3_ref[...]) + h
        # layer 4: Dense(out_features=1, no activation), computed as
        # (1, Hp) x (M, Hp)^T -> (1, M) so the store is a single lane-dense row.
        y = jax.lax.dot_general(w4_ref[...], h, (((1,), (1,)), ((), ())),
                                precision=precision,
                                preferred_element_type=jnp.float32)
        o_ref[...] = y + b4_ref[...]                          # (1, M) + (1, 1)

    @pl.when(jnp.logical_not(valid))
    def _():
        # pure-padding chunk (static +T grid slack): skip the matmul chain.
        o_ref[...] = jnp.zeros_like(o_ref)


def _round_up(v, m):
    return -(-v // m) * m


def _pad_feature_dim(d):
    """Lane-pad a feature dim: next multiple of 128 when > 128, else unchanged."""
    if d > 128 and d % 128 != 0:
        return _round_up(d, 128)
    return d


def fitting_forward(x, channels, params, *, atom_tile=None,
                    precision=jax.lax.Precision.DEFAULT):
    """x: (B, N, IN) float32 ; channels: (N,) int ; returns (B, N, 1) float32."""
    (w1, b1), (w2, b2), (w3, b3), (w4, b4) = params
    B, N, IN = x.shape
    T, H, _ = w1.shape
    assert w1.shape[2] == IN
    assert w2.shape[1] == w2.shape[2] == H and w3.shape[1] == w3.shape[2] == H, (
        "residual layers require out_features == in_features")
    assert w4.shape[1] == 1 and w4.shape[2] == H
    # TODO(synk): the Dense concat-residual branch (out_features == 2*in_features)
    # is never used by Fitting's configuration and is not implemented here.

    # ---- lane-pad feature dims (e.g. neuron=240 -> 256); zero pad is exact ---
    INp, Hp = _pad_feature_dim(IN), _pad_feature_dim(H)

    # ---- per-chunk atom tile: M = A*B rows, multiple of 128 ------------------
    if atom_tile is None:
        lane_mult = 128 // math.gcd(B, 128)       # smallest A with A*B % 128 == 0
        # ~512 MXU rows/step for narrow hidden sizes; fewer for wide hidden
        # sizes so the residual live set (2*M*Hp f32) stays near the vreg file.
        target_rows = 512 if Hp <= 128 else 256
        A = _round_up(-(-target_rows // B), lane_mult)
        A = min(A, _round_up(N, lane_mult))       # no point exceeding (padded) N
        A = max(A, lane_mult)
    else:
        A = int(atom_tile)
        assert (A * B) % 128 == 0, "atom_tile * batch must be a multiple of 128"
    M = A * B
    num_chunks = -(-N // A) + T                   # safe static upper bound
    N_pad = num_chunks * A

    channels = jnp.clip(channels.astype(jnp.int32), 0, T - 1)

    # ---- group atoms by type, pad each group to a chunk multiple -------------
    types = jnp.arange(T, dtype=jnp.int32)
    counts = jnp.sum((channels[None, :] == types[:, None]).astype(jnp.int32), axis=1)
    group_chunks = (counts + A - 1) // A
    chunk_end = jnp.cumsum(group_chunks)
    chunk_start = chunk_end - group_chunks
    group_row_start = chunk_start * A             # padded atom slot per type

    order = jnp.argsort(channels)
    sorted_ch = channels[order]
    sorted_group_start = jnp.cumsum(counts) - counts
    rank_sorted = jnp.arange(N, dtype=jnp.int32) - sorted_group_start[sorted_ch]
    dest_sorted = group_row_start[sorted_ch] + rank_sorted
    dest_idx = jnp.zeros((N,), jnp.int32).at[order].set(dest_sorted)  # atom -> slot

    cidx = jnp.arange(num_chunks, dtype=jnp.int32)
    chunk_type = jnp.minimum(
        jnp.sum((cidx[:, None] >= chunk_end[None, :]).astype(jnp.int32), axis=1),
        T - 1).astype(jnp.int32)
    chunk_valid = (cidx < chunk_end[T - 1]).astype(jnp.int32)

    # one transpose+scatter pass: (B, N, IN) -> grouped, padded (N_pad, B, INp).
    # TODO(synk): this costs one extra HBM read+write of x; when `channels` is
    # static across calls, hoist dest_idx / x_pad out of the step function (or
    # gather in-kernel from a per-chunk atom-slot table) to reach the x-read
    # roofline.
    x_nb = jnp.transpose(x, (1, 0, 2))                        # (N, B, IN)
    if INp != IN:
        x_nb = jnp.pad(x_nb, ((0, 0), (0, 0), (0, INp - IN)))
    x_pad = jnp.zeros((N_pad, B, INp), x.dtype).at[dest_idx].set(
        x_nb, unique_indices=True)
    x_rows = x_pad.reshape(num_chunks, M, INp)                # contiguous reshape

    # ---- weights pre-transposed to (T, in, out), zero-padded to lane width ---
    def pad_w(w_t, in_p, out_p):                              # w_t: (T, in, out)
        return jnp.pad(w_t, ((0, 0), (0, in_p - w_t.shape[1]),
                             (0, out_p - w_t.shape[2])))

    w1t = pad_w(jnp.transpose(w1, (0, 2, 1)), INp, Hp)        # (T, INp, Hp)
    w2t = pad_w(jnp.transpose(w2, (0, 2, 1)), Hp, Hp)         # (T, Hp, Hp)
    w3t = pad_w(jnp.transpose(w3, (0, 2, 1)), Hp, Hp)         # (T, Hp, Hp)
    b1r = jnp.pad(b1.reshape(T, 1, H), ((0, 0), (0, 0), (0, Hp - H)))
    b2r = jnp.pad(b2.reshape(T, 1, H), ((0, 0), (0, 0), (0, Hp - H)))
    b3r = jnp.pad(b3.reshape(T, 1, H), ((0, 0), (0, 0), (0, Hp - H)))
    w4r = jnp.pad(w4.reshape(T, 1, H), ((0, 0), (0, 0), (0, Hp - H)))
    b4r = b4.reshape(T, 1, 1)

    # Per-type weight blocks streamed by the prefetched chunk->type table.
    # Chunks are sorted by type, so consecutive equal block indices skip the
    # re-DMA; VMEM holds at most 2 types' weights (double buffer), not T.
    def wspec(in_d, out_d):
        return pl.BlockSpec((None, in_d, out_d), lambda c, ct, cv: (ct[c], 0, 0))

    grid_spec = pltpu.PrefetchScalarGridSpec(
        num_scalar_prefetch=2,
        grid=(num_chunks,),
        in_specs=[
            pl.BlockSpec((None, M, INp), lambda c, ct, cv: (c, 0, 0)),  # x chunk
            wspec(INp, Hp),                                             # W1^T
            wspec(1, Hp),                                               # b1
            wspec(Hp, Hp),                                              # W2^T
            wspec(1, Hp),                                               # b2
            wspec(Hp, Hp),                                              # W3^T
            wspec(1, Hp),                                               # b3
            wspec(1, Hp),                                               # W4 row
            wspec(1, 1),                                                # b4
        ],
        out_specs=pl.BlockSpec((None, 1, M), lambda c, ct, cv: (c, 0, 0)),
    )

    # VMEM budget: double-buffered per-type weights + x / out double buffers.
    weight_block_bytes = 4 * (INp * Hp + 2 * Hp * Hp + 4 * Hp + 1)
    vmem_bytes = (2 * weight_block_bytes + 2 * M * INp * 4 + 2 * M * 4
                  + (4 << 20))                                # headroom
    vmem_bytes = int(min(max(vmem_bytes, 16 << 20), 64 << 20))

    cost = pl.CostEstimate(
        flops=2 * num_chunks * M * (INp * Hp + 2 * Hp * Hp + Hp),
        transcendentals=3 * num_chunks * M * Hp,
        bytes_accessed=int(x_rows.size * 4 + num_chunks * M * 4
                           + (w1t.size + w2t.size + w3t.size + w4r.size
                              + b1r.size + b2r.size + b3r.size + b4r.size) * 4),
    )

    out = pl.pallas_call(
        partial(_fitting_kernel, precision=precision),
        out_shape=jax.ShapeDtypeStruct((num_chunks, 1, M), jnp.float32),
        grid_spec=grid_spec,
        compiler_params=pltpu.CompilerParams(
            dimension_semantics=("parallel",),
            vmem_limit_bytes=vmem_bytes),
        cost_estimate=cost,
    )(chunk_type, chunk_valid, x_rows, w1t, b1r, w2t, b2r, w3t, b3r, w4r, b4r)

    # ---- un-group: gather back to original atom order -> (B, N, 1) -----------
    out_pad = out.reshape(N_pad, B)
    out_nb = out_pad[dest_idx]                                # (N, B)
    return jnp.transpose(out_nb)[:, :, None]                  # (B, N, 1)


def init_dense_params(key, n_types, in_f, out_f):
    """Deterministic kaiming_uniform(a=sqrt(5))-style init, per-type weights."""
    kw, kb = jax.random.split(key)
    bound = 1.0 / math.sqrt(in_f)
    w = jax.random.uniform(kw, (n_types, out_f, in_f), jnp.float32, -bound, bound)
    b = jax.random.uniform(kb, (n_types, out_f), jnp.float32, -bound, bound)
    return w, b


def reference_forward(x, channels, params):
    """Pure-JAX reference mirroring the PyTorch Dense/Sequential semantics."""
    prec = jax.lax.Precision.HIGHEST

    def dense(h, w, b, activation, residual):
        wc = w[channels]                            # (N, out, in)
        bc = b[channels]                            # (N, out)
        out = jnp.einsum('bni,noi->bno', h, wc, precision=prec) + bc[None]
        if activation:
            out = jnp.tanh(out)
        if residual:
            out = out + h                           # out_features == in_features
        return out

    (w1, b1), (w2, b2), (w3, b3), (w4, b4) = params
    h = dense(x, w1, b1, True, False)
    h = dense(h, w2, b2, True, True)
    h = dense(h, w3, b3, True, True)
    return dense(h, w4, b4, False, False)           # (B, N, 1)


if __name__ == "__main__":
    # Small shapes consistent with Fitting(n_types, in_features, neuron)
    n_types = 2
    in_features = 64
    neuron = [240, 240, 240]                        # module default hidden width
    B, N = 8, 32                                    # batch, atoms

    key = jax.random.PRNGKey(0)
    k_x, k_ch, k1, k2, k3, k4 = jax.random.split(key, 6)

    x = jax.random.normal(k_x, (B, N, in_features), jnp.float32)
    channels = jax.random.randint(k_ch, (N,), 0, n_types, jnp.int32)

    params = [
        init_dense_params(k1, n_types, in_features, neuron[0]),
        init_dense_params(k2, n_types, neuron[0], neuron[1]),
        init_dense_params(k3, n_types, neuron[1], neuron[2]),
        init_dense_params(k4, n_types, neuron[2], 1),
    ]

    out = jax.jit(fitting_forward)(x, channels, params)
    out = jax.block_until_ready(out)

    ref = reference_forward(x, channels, params)
    assert out.shape == (B, N, 1), out.shape
    # Kernel uses DEFAULT (single bf16 MXU pass) precision vs an f32-HIGHEST
    # reference -> relaxed tolerance (deliberate, per perf review).
    np.testing.assert_allclose(np.asarray(out), np.asarray(ref),
                               rtol=3e-2, atol=3e-2)
    print("KERNEL_OK")
</pallas_src>

<mosaic_0001>
module attributes {stable_mosaic.version = 11 : i64} {
  func.func @_fitting_kernel(%arg0: i32, %arg1: memref<3xi32, #tpu.memory_space<smem>>, %arg2: memref<3xi32, #tpu.memory_space<smem>>, %arg3: memref<1x256x64xf32, #tpu.memory_space<vmem>>, %arg4: memref<1x64x256xf32, #tpu.memory_space<vmem>>, %arg5: memref<1x1x256xf32, #tpu.memory_space<vmem>>, %arg6: memref<1x256x256xf32, #tpu.memory_space<vmem>>, %arg7: memref<1x1x256xf32, #tpu.memory_space<vmem>>, %arg8: memref<1x256x256xf32, #tpu.memory_space<vmem>>, %arg9: memref<1x1x256xf32, #tpu.memory_space<vmem>>, %arg10: memref<1x1x256xf32, #tpu.memory_space<vmem>>, %arg11: memref<1x1x1xf32, #tpu.memory_space<vmem>>, %arg12: memref<1x1x256xf32, #tpu.memory_space<vmem>>) attributes {dimension_semantics = [#tpu.dimension_semantics<parallel>], iteration_bounds = array<i64: 3>, scalar_prefetch = 2 : i64, scratch_operands = 0 : i64, tpu.core_type = #tpu.core_type<tc>, window_params = [{transform_indices = @transform_0, window_bounds = array<i64: 1, 256, 64>}, {transform_indices = @transform_1, window_bounds = array<i64: 1, 64, 256>}, {transform_indices = @transform_2, window_bounds = array<i64: 1, 1, 256>}, {transform_indices = @transform_3, window_bounds = array<i64: 1, 256, 256>}, {transform_indices = @transform_4, window_bounds = array<i64: 1, 1, 256>}, {transform_indices = @transform_5, window_bounds = array<i64: 1, 256, 256>}, {transform_indices = @transform_6, window_bounds = array<i64: 1, 1, 256>}, {transform_indices = @transform_7, window_bounds = array<i64: 1, 1, 256>}, {transform_indices = @transform_8, window_bounds = array<i64: 1, 1, 1>}, {transform_indices = @transform_9, window_bounds = array<i64: 1, 1, 256>}]} {
    %0 = arith.index_cast %arg0 : i32 to index
    %1 = memref.load %arg2[%0] : memref<3xi32, #tpu.memory_space<smem>>
    %c0_i32 = arith.constant 0 : i32
    %2 = arith.cmpi ne, %1, %c0_i32 : i32
    %3 = arith.extui %2 : i1 to i32
    %c0_i32_0 = arith.constant 0 : i32
    %4 = arith.cmpi ne, %3, %c0_i32_0 : i32
    scf.if %4 {
      %c0 = arith.constant 0 : index
      %c0_2 = arith.constant 0 : index
      %c0_3 = arith.constant 0 : index
      %8 = vector.load %arg3[%c0, %c0_2, %c0_3] : memref<1x256x64xf32, #tpu.memory_space<vmem>>, vector<1x256x64xf32>
      %9 = vector.shape_cast %8 : vector<1x256x64xf32> to vector<256x64xf32>
      %c0_4 = arith.constant 0 : index
      %c0_5 = arith.constant 0 : index
      %c0_6 = arith.constant 0 : index
      %10 = vector.load %arg4[%c0_4, %c0_5, %c0_6] : memref<1x64x256xf32, #tpu.memory_space<vmem>>, vector<1x64x256xf32>
      %11 = vector.shape_cast %10 : vector<1x64x256xf32> to vector<64x256xf32>
      %cst = arith.constant dense<0.000000e+00> : vector<256x256xf32>
      %12 = tpu.matmul %9, %11, %cst {dimension_numbers = #tpu.dot_dimension_numbers<[1], [0], [0], [1], [0, 0, 1, 1], [], []>} : vector<256x64xf32>, vector<64x256xf32>, vector<256x256xf32> -> vector<256x256xf32>
      %c0_7 = arith.constant 0 : index
      %c0_8 = arith.constant 0 : index
      %c0_9 = arith.constant 0 : index
      %13 = vector.load %arg5[%c0_7, %c0_8, %c0_9] : memref<1x1x256xf32, #tpu.memory_space<vmem>>, vector<1x1x256xf32>
      %14 = vector.shape_cast %13 : vector<1x1x256xf32> to vector<1x256xf32>
      %15 = vector.broadcast %14 : vector<1x256xf32> to vector<256x256xf32>
      %16 = arith.addf %12, %15 : vector<256x256xf32>
      %17 = math.tanh %16 : vector<256x256xf32>
      %c0_10 = arith.constant 0 : index
      %c0_11 = arith.constant 0 : index
      %c0_12 = arith.constant 0 : index
      %18 = vector.load %arg6[%c0_10, %c0_11, %c0_12] : memref<1x256x256xf32, #tpu.memory_space<vmem>>, vector<1x256x256xf32>
      %19 = vector.shape_cast %18 : vector<1x256x256xf32> to vector<256x256xf32>
      %cst_13 = arith.constant dense<0.000000e+00> : vector<256x256xf32>
      %20 = tpu.matmul %17, %19, %cst_13 {dimension_numbers = #tpu.dot_dimension_numbers<[1], [0], [0], [1], [0, 0, 1, 1], [], []>} : vector<256x256xf32>, vector<256x256xf32>, vector<256x256xf32> -> vector<256x256xf32>
      %c0_14 = arith.constant 0 : index
      %c0_15 = arith.constant 0 : index
      %c0_16 = arith.constant 0 : index
      %21 = vector.load %arg7[%c0_14, %c0_15, %c0_16] : memref<1x1x256xf32, #tpu.memory_space<vmem>>, vector<1x1x256xf32>
      %22 = vector.shape_cast %21 : vector<1x1x256xf32> to vector<1x256xf32>
      %23 = vector.broadcast %22 : vector<1x256xf32> to vector<256x256xf32>
      %24 = arith.addf %20, %23 : vector<256x256xf32>
      %25 = math.tanh %24 : vector<256x256xf32>
      %26 = arith.addf %25, %17 : vector<256x256xf32>
      %c0_17 = arith.constant 0 : index
      %c0_18 = arith.constant 0 : index
      %c0_19 = arith.constant 0 : index
      %27 = vector.load %arg8[%c0_17, %c0_18, %c0_19] : memref<1x256x256xf32, #tpu.memory_space<vmem>>, vector<1x256x256xf32>
      %28 = vector.shape_cast %27 : vector<1x256x256xf32> to vector<256x256xf32>
      %cst_20 = arith.constant dense<0.000000e+00> : vector<256x256xf32>
      %29 = tpu.matmul %26, %28, %cst_20 {dimension_numbers = #tpu.dot_dimension_numbers<[1], [0], [0], [1], [0, 0, 1, 1], [], []>} : vector<256x256xf32>, vector<256x256xf32>, vector<256x256xf32> -> vector<256x256xf32>
      %c0_21 = arith.constant 0 : index
      %c0_22 = arith.constant 0 : index
      %c0_23 = arith.constant 0 : index
      %30 = vector.load %arg9[%c0_21, %c0_22, %c0_23] : memref<1x1x256xf32, #tpu.memory_space<vmem>>, vector<1x1x256xf32>
      %31 = vector.shape_cast %30 : vector<1x1x256xf32> to vector<1x256xf32>
      %32 = vector.broadcast %31 : vector<1x256xf32> to vector<256x256xf32>
      %33 = arith.addf %29, %32 : vector<256x256xf32>
      %34 = math.tanh %33 : vector<256x256xf32>
      %35 = arith.addf %34, %26 : vector<256x256xf32>
      %c0_24 = arith.constant 0 : index
      %c0_25 = arith.constant 0 : index
      %c0_26 = arith.constant 0 : index
      %36 = vector.load %arg10[%c0_24, %c0_25, %c0_26] : memref<1x1x256xf32, #tpu.memory_space<vmem>>, vector<1x1x256xf32>
      %37 = vector.shape_cast %36 : vector<1x1x256xf32> to vector<1x256xf32>
      %cst_27 = arith.constant dense<0.000000e+00> : vector<1x256xf32>
      %38 = tpu.matmul %37, %35, %cst_27 {dimension_numbers = #tpu.dot_dimension_numbers<[1], [1], [0], [0], [0, 0, 1, 0], [], []>} : vector<1x256xf32>, vector<256x256xf32>, vector<1x256xf32> -> vector<1x256xf32>
      %c0_28 = arith.constant 0 : index
      %c0_29 = arith.constant 0 : index
      %c0_30 = arith.constant 0 : index
      %39 = vector.load %arg11[%c0_28, %c0_29, %c0_30] : memref<1x1x1xf32, #tpu.memory_space<vmem>>, vector<1x1x1xf32>
      %40 = vector.shape_cast %39 : vector<1x1x1xf32> to vector<1x1xf32>
      %41 = vector.broadcast %40 : vector<1x1xf32> to vector<1x256xf32>
      %42 = arith.addf %38, %41 : vector<1x256xf32>
      %c0_31 = arith.constant 0 : index
      %c0_32 = arith.constant 0 : index
      %c0_33 = arith.constant 0 : index
      %43 = vector.load %arg12[%c0_31, %c0_32, %c0_33] : memref<1x1x256xf32, #tpu.memory_space<vmem>>, vector<1x1x256xf32>
      %44 = vector.shape_cast %43 : vector<1x1x256xf32> to vector<1x256xf32>
      %45 = vector.shape_cast %42 : vector<1x256xf32> to vector<1x1x256xf32>
      tpu.vector_store %arg12[%c0_31, %c0_32, %c0_33], %45 {strides = array<i32>} : memref<1x1x256xf32, #tpu.memory_space<vmem>>, vector<1x1x256xf32>,
    } else {
    }
    %true = arith.constant true
    %5 = arith.xori %2, %true : i1
    %6 = arith.extui %5 : i1 to i32
    %c0_i32_1 = arith.constant 0 : i32
    %7 = arith.cmpi ne, %6, %c0_i32_1 : i32
    scf.if %7 {
      %cst = arith.constant 0.000000e+00 : f32
      %8 = vector.broadcast %cst : f32 to vector<1x256xf32>
      %c0 = arith.constant 0 : index
      %c0_2 = arith.constant 0 : index
      %c0_3 = arith.constant 0 : index
      %9 = vector.load %arg12[%c0, %c0_2, %c0_3] : memref<1x1x256xf32, #tpu.memory_space<vmem>>, vector<1x1x256xf32>
      %10 = vector.shape_cast %9 : vector<1x1x256xf32> to vector<1x256xf32>
      %11 = vector.shape_cast %8 : vector<1x256xf32> to vector<1x1x256xf32>
      tpu.vector_store %arg12[%c0, %c0_2, %c0_3], %11 {strides = array<i32>} : memref<1x1x256xf32, #tpu.memory_space<vmem>>, vector<1x1x256xf32>,
    } else {
    }
    return
  }
  func.func @transform_0(%arg0: i32, %arg1: memref<3xi32, #tpu.memory_space<smem>>, %arg2: memref<3xi32, #tpu.memory_space<smem>>) -> (i32, i32, i32) {
    %c0_i32 = arith.constant 0 : i32
    %c0_i32_0 = arith.constant 0 : i32
    %c0_i32_1 = arith.constant 0 : i32
    return %arg0, %c0_i32, %c0_i32_0 : i32, i32, i32
  }
  func.func @transform_1(%arg0: i32, %arg1: memref<3xi32, #tpu.memory_space<smem>>, %arg2: memref<3xi32, #tpu.memory_space<smem>>) -> (i32, i32, i32) {
    %0 = arith.index_cast %arg0 : i32 to index
    %1 = memref.load %arg1[%0] : memref<3xi32, #tpu.memory_space<smem>>
    %c0_i32 = arith.constant 0 : i32
    %c0_i32_0 = arith.constant 0 : i32
    %c0_i32_1 = arith.constant 0 : i32
    return %1, %c0_i32, %c0_i32_0 : i32, i32, i32
  }
  func.func @transform_2(%arg0: i32, %arg1: memref<3xi32, #tpu.memory_space<smem>>, %arg2: memref<3xi32, #tpu.memory_space<smem>>) -> (i32, i32, i32) {
    %0 = arith.index_cast %arg0 : i32 to index
    %1 = memref.load %arg1[%0] : memref<3xi32, #tpu.memory_space<smem>>
    %c0_i32 = arith.constant 0 : i32
    %c0_i32_0 = arith.constant 0 : i32
    %c0_i32_1 = arith.constant 0 : i32
    return %1, %c0_i32, %c0_i32_0 : i32, i32, i32
  }
  func.func @transform_3(%arg0: i32, %arg1: memref<3xi32, #tpu.memory_space<smem>>, %arg2: memref<3xi32, #tpu.memory_space<smem>>) -> (i32, i32, i32) {
    %0 = arith.index_cast %arg0 : i32 to index
    %1 = memref.load %arg1[%0] : memref<3xi32, #tpu.memory_space<smem>>
    %c0_i32 = arith.constant 0 : i32
    %c0_i32_0 = arith.constant 0 : i32
    %c0_i32_1 = arith.constant 0 : i32
    return %1, %c0_i32, %c0_i32_0 : i32, i32, i32
  }
  func.func @transform_4(%arg0: i32, %arg1: memref<3xi32, #tpu.memory_space<smem>>, %arg2: memref<3xi32, #tpu.memory_space<smem>>) -> (i32, i32, i32) {
    %0 = arith.index_cast %arg0 : i32 to index
    %1 = memref.load %arg1[%0] : memref<3xi32, #tpu.memory_space<smem>>
    %c0_i32 = arith.constant 0 : i32
    %c0_i32_0 = arith.constant 0 : i32
    %c0_i32_1 = arith.constant 0 : i32
    return %1, %c0_i32, %c0_i32_0 : i32, i32, i32
  }
  func.func @transform_5(%arg0: i32, %arg1: memref<3xi32, #tpu.memory_space<smem>>, %arg2: memref<3xi32, #tpu.memory_space<smem>>) -> (i32, i32, i32) {
    %0 = arith.index_cast %arg0 : i32 to index
    %1 = memref.load %arg1[%0] : memref<3xi32, #tpu.memory_space<smem>>
    %c0_i32 = arith.constant 0 : i32
    %c0_i32_0 = arith.constant 0 : i32
    %c0_i32_1 = arith.constant 0 : i32
    return %1, %c0_i32, %c0_i32_0 : i32, i32, i32
  }
  func.func @transform_6(%arg0: i32, %arg1: memref<3xi32, #tpu.memory_space<smem>>, %arg2: memref<3xi32, #tpu.memory_space<smem>>) -> (i32, i32, i32) {
    %0 = arith.index_cast %arg0 : i32 to index
    %1 = memref.load %arg1[%0] : memref<3xi32, #tpu.memory_space<smem>>
    %c0_i32 = arith.constant 0 : i32
    %c0_i32_0 = arith.constant 0 : i32
    %c0_i32_1 = arith.constant 0 : i32
    return %1, %c0_i32, %c0_i32_0 : i32, i32, i32
  }
  func.func @transform_7(%arg0: i32, %arg1: memref<3xi32, #tpu.memory_space<smem>>, %arg2: memref<3xi32, #tpu.memory_space<smem>>) -> (i32, i32, i32) {
    %0 = arith.index_cast %arg0 : i32 to index
    %1 = memref.load %arg1[%0] : memref<3xi32, #tpu.memory_space<smem>>
    %c0_i32 = arith.constant 0 : i32
    %c0_i32_0 = arith.constant 0 : i32
    %c0_i32_1 = arith.constant 0 : i32
    return %1, %c0_i32, %c0_i32_0 : i32, i32, i32
  }
  func.func @transform_8(%arg0: i32, %arg1: memref<3xi32, #tpu.memory_space<smem>>, %arg2: memref<3xi32, #tpu.memory_space<smem>>) -> (i32, i32, i32) {
    %0 = arith.index_cast %arg0 : i32 to index
    %1 = memref.load %arg1[%0] : memref<3xi32, #tpu.memory_space<smem>>
    %c0_i32 = arith.constant 0 : i32
    %c0_i32_0 = arith.constant 0 : i32
    %c0_i32_1 = arith.constant 0 : i32
    return %1, %c0_i32, %c0_i32_0 : i32, i32, i32
  }
  func.func @transform_9(%arg0: i32, %arg1: memref<3xi32, #tpu.memory_space<smem>>, %arg2: memref<3xi32, #tpu.memory_space<smem>>) -> (i32, i32, i32) {
    %c0_i32 = arith.constant 0 : i32
    %c0_i32_0 = arith.constant 0 : i32
    %c0_i32_1 = arith.constant 0 : i32
    return %arg0, %c0_i32, %c0_i32_0 : i32, i32, i32
  }
}

</mosaic_0001>

<llo_original>
// kernel: fitting_forward.1
$region0: #{fitting_forward.1}
  #allocation0 [shape = 'u32[]', space=smem, size = 0x4, offset = 0x4, fixed_abs, tag = 'smem constant byte address 0x4 - core index']
  #allocation1 [shape = 'u32[72,128]{1,0:T(1,128)}', space=vmem, size = 0x9000, scoped, tag = 'internal scratch']
  #allocation2 [shape = 's32[1]{0}', space=sflag, size = 0x4, scoped, tag = 'scoped memory for fitting_forward.1']
  #allocation3 [shape = 'u8[512]{0}', space=smem, size = 0x200, scoped, tag = 'prefetched SMEM operand 0']
  #allocation4 [shape = 'u8[512]{0}', space=smem, size = 0x200, scoped, tag = 'prefetched SMEM operand 1']
  %s0 = inlined_call_operand.vmem [shape: s32[3], index: 0, kind: input, shape index: {}]
  %s1 = inlined_call_operand.vmem [shape: s32[3], index: 1, kind: input, shape index: {}]
  %s2 = inlined_call_operand.vmem [shape: f32[3,256,64], index: 2, kind: input, shape index: {}]
  %s3 = inlined_call_operand.vmem [shape: f32[2,64,256], index: 3, kind: input, shape index: {}]
  %s4 = inlined_call_operand.vmem [shape: f32[2,1,256], index: 4, kind: input, shape index: {}]
  %s5 = inlined_call_operand.vmem [shape: f32[2,256,256], index: 5, kind: input, shape index: {}]
  %s6 = inlined_call_operand.vmem [shape: f32[2,1,256], index: 6, kind: input, shape index: {}]
  %s7 = inlined_call_operand.vmem [shape: f32[2,256,256], index: 7, kind: input, shape index: {}]
  %s8 = inlined_call_operand.vmem [shape: f32[2,1,256], index: 8, kind: input, shape index: {}]
  %s9 = inlined_call_operand.vmem [shape: f32[2,1,256], index: 9, kind: input, shape index: {}]
  %s10 = inlined_call_operand.vmem [shape: f32[2,1,1], index: 10, kind: input, shape index: {}]
  %s11 = inlined_call_operand.vmem [shape: f32[3,1,256], index: 11, kind: output, shape index: {}]
  %s12 = sld [smem:[#allocation0]]
  $region77: #{fitting_forward.1} parent=0
    _
  %s14 = ssub.s32 1, %s12
  %s15 = scalar_select 0, %s14, %s12
  %s17 = sshll.u32 %s0, 4
  %s18 = int_to_ptr.vmem [resolvable:$true] %s17
  %20 = dma.vmem_to_smem %s18, 16, [#allocation3], [#allocation2]
  %s22 = sshll.u32 %s1, 4
  %s23 = int_to_ptr.vmem [resolvable:$true] %s22
  %25 = dma.vmem_to_smem %s23, 16, [#allocation4], [#allocation2]
  %27 = dma.done [#allocation2], 32
  %28 = sfence
  loop: start=0, step=1, limit=5
  $region2: #{fitting_forward.1} parent=0 // loop_pre_header
    _
  $region3: #{fitting_forward.1} parent=0 // loop_header
    %s30 = sphi 0, %s34
    %p31 = scmp.ge.s32.totalorder %s30, 5
    %s40 = sphi 0, %s42
    %s43 = sphi 0, %s40
    %s44 = sphi 0, %s43
    %s60 = sphi 0, %s44
    %s68 = sphi 0, %s70
    %s71 = sphi 0, %s68
    %s72 = sphi 0, %s71
    %s88 = sphi 0, %s72
    %s96 = sphi 0, %s98
    %s99 = sphi 0, %s96
    %s100 = sphi 0, %s99
    %s116 = sphi 0, %s100
    %s124 = sphi 0, %s126
    %s127 = sphi 0, %s124
    %s128 = sphi 0, %s127
    %s144 = sphi 0, %s128
    %s152 = sphi 0, %s154
    %s155 = sphi 0, %s152
    %s156 = sphi 0, %s155
    %s172 = sphi 0, %s156
    %s180 = sphi 0, %s182
    %s183 = sphi 0, %s180
    %s184 = sphi 0, %s183
    %s200 = sphi 0, %s184
    %s208 = sphi 0, %s210
    %s211 = sphi 0, %s208
    %s212 = sphi 0, %s211
    %s228 = sphi 0, %s212
    %s236 = sphi 0, %s238
    %s239 = sphi 0, %s236
    %s240 = sphi 0, %s239
    %s256 = sphi 0, %s240
    %s264 = sphi 0, %s266
    %s267 = sphi 0, %s264
    %s268 = sphi 0, %s267
    %s284 = sphi 0, %s268
    %s290 = sphi 0, %s292
    %s293 = sphi 0, %s290
    %s294 = sphi 0, %s293
    %s310 = sphi 0, %s294
  $region4: #{fitting_forward.1} parent=0 // loop_header_branch
    %33 = sbr.rel (%p31) target = $region8
  $region5: #{fitting_forward.1} parent=0 // loop_body
    %s35 = ssub.s32 %s30, 1
    %s36 = ssub.s32 %s30, 2
    %s37 = sadd.s32 %s30, 1
    %s38 = ssub.s32 %s30, %s37
    %p39 = scmp.eq.s32.totalorder %s38, 0
    %s41 = sadd.s32 %s40, 1
    %s42 = scalar_select %p39, %s40, %s41
    %p45 = pneg %p39
    %p46 = scmp.eq.s32.totalorder %s30, 2
    %p47 = por %p45, %p46
    %p48 = scmp.ne.s32.totalorder %s40, %s43
    %p49 = scmp.eq.s32.totalorder %s30, 0
    %p50 = por %p48, %p49
    %p51 = scmp.ne.s32.totalorder %s40, %s43
    %p52 = scmp.eq.s32.totalorder %s35, 2
    %p53 = por %p51, %p52
    %p54 = scmp.ne.s32.totalorder %s43, %s44
    %p55 = scmp.eq.s32.totalorder %s35, 0
    %p56 = por %p54, %p55
    %p57 = scmp.ne.s32.totalorder %s43, %s44
    %p58 = scmp.eq.s32.totalorder %s36, 2
    %p59 = por %p57, %p58
    %p61 = scmp.ne.s32.totalorder %s44, %s60
    %p62 = scmp.eq.s32.totalorder %s36, 0
    %p63 = por %p61, %p62
    %s64 = sld [smem:[#allocation3 + %s30]]
    %s65 = sld [smem:[#allocation3 + %s37]]
    %s66 = ssub.s32 %s64, %s65
    %p67 = scmp.eq.s32.totalorder %s66, 0
    %s69 = sadd.s32 %s68, 1
    %s70 = scalar_select %p67, %s68, %s69
    %p73 = pneg %p67
    %p74 = scmp.eq.s32.totalorder %s30, 2
    %p75 = por %p73, %p74
    %p76 = scmp.ne.s32.totalorder %s68, %s71
    %p77 = scmp.eq.s32.totalorder %s30, 0
    %p78 = por %p76, %p77
    %p79 = scmp.ne.s32.totalorder %s68, %s71
    %p80 = scmp.eq.s32.totalorder %s35, 2
    %p81 = por %p79, %p80
    %p82 = scmp.ne.s32.totalorder %s71, %s72
    %p83 = scmp.eq.s32.totalorder %s35, 0
    %p84 = por %p82, %p83
    %p85 = scmp.ne.s32.totalorder %s71, %s72
    %p86 = scmp.eq.s32.totalorder %s36, 2
    %p87 = por %p85, %p86
    %p89 = scmp.ne.s32.totalorder %s72, %s88
    %p90 = scmp.eq.s32.totalorder %s36, 0
    %p91 = por %p89, %p90
    %s92 = sld [smem:[#allocation3 + %s30]]
    %s93 = sld [smem:[#allocation3 + %s37]]
    %s94 = ssub.s32 %s92, %s93
    %p95 = scmp.eq.s32.totalorder %s94, 0
    %s97 = sadd.s32 %s96, 1
    %s98 = scalar_select %p95, %s96, %s97
    %p101 = pneg %p95
    %p102 = scmp.eq.s32.totalorder %s30, 2
    %p103 = por %p101, %p102
    %p104 = scmp.ne.s32.totalorder %s96, %s99
    %p105 = scmp.eq.s32.totalorder %s30, 0
    %p106 = por %p104, %p105
    %p107 = scmp.ne.s32.totalorder %s96, %s99
    %p108 = scmp.eq.s32.totalorder %s35, 2
    %p109 = por %p107, %p108
    %p110 = scmp.ne.s32.totalorder %s99, %s100
    %p111 = scmp.eq.s32.totalorder %s35, 0
    %p112 = por %p110, %p111
    %p113 = scmp.ne.s32.totalorder %s99, %s100
    %p114 = scmp.eq.s32.totalorder %s36, 2
    %p115 = por %p113, %p114
    %p117 = scmp.ne.s32.totalorder %s100, %s116
    %p118 = scmp.eq.s32.totalorder %s36, 0
    %p119 = por %p117, %p118
    %s120 = sld [smem:[#allocation3 + %s30]]
    %s121 = sld [smem:[#allocation3 + %s37]]
    %s122 = ssub.s32 %s120, %s121
    %p123 = scmp.eq.s32.totalorder %s122, 0
    %s125 = sadd.s32 %s124, 1
    %s126 = scalar_select %p123, %s124, %s125
    %p129 = pneg %p123
    %p130 = scmp.eq.s32.totalorder %s30, 2
    %p131 = por %p129, %p130
    %p132 = scmp.ne.s32.totalorder %s124, %s127
    %p133 = scmp.eq.s32.totalorder %s30, 0
    %p134 = por %p132, %p133
    %p135 = scmp.ne.s32.totalorder %s124, %s127
    %p136 = scmp.eq.s32.totalorder %s35, 2
    %p137 = por %p135, %p136
    %p138 = scmp.ne.s32.totalorder %s127, %s128
    %p139 = scmp.eq.s32.totalorder %s35, 0
    %p140 = por %p138, %p139
    %p141 = scmp.ne.s32.totalorder %s127, %s128
    %p142 = scmp.eq.s32.totalorder %s36, 2
    %p143 = por %p141, %p142
    %p145 = scmp.ne.s32.totalorder %s128, %s144
    %p146 = scmp.eq.s32.totalorder %s36, 0
    %p147 = por %p145, %p146
    %s148 = sld [smem:[#allocation3 + %s30]]
    %s149 = sld [smem:[#allocation3 + %s37]]
    %s150 = ssub.s32 %s148, %s149
    %p151 = scmp.eq.s32.totalorder %s150, 0
    %s153 = sadd.s32 %s152, 1
    %s154 = scalar_select %p151, %s152, %s153
    %p157 = pneg %p151
    %p158 = scmp.eq.s32.totalorder %s30, 2
    %p159 = por %p157, %p158
    %p160 = scmp.ne.s32.totalorder %s152, %s155
    %p161 = scmp.eq.s32.totalorder %s30, 0
    %p162 = por %p160, %p161
    %p163 = scmp.ne.s32.totalorder %s152, %s155
    %p164 = scmp.eq.s32.totalorder %s35, 2
    %p165 = por %p163, %p164
    %p166 = scmp.ne.s32.totalorder %s155, %s156
    %p167 = scmp.eq.s32.totalorder %s35, 0
    %p168 = por %p166, %p167
    %p169 = scmp.ne.s32.totalorder %s155, %s156
    %p170 = scmp.eq.s32.totalorder %s36, 2
    %p171 = por %p169, %p170
    %p173 = scmp.ne.s32.totalorder %s156, %s172
    %p174 = scmp.eq.s32.totalorder %s36, 0
    %p175 = por %p173, %p174
    %s176 = sld [smem:[#allocation3 + %s30]]
    %s177 = sld [smem:[#allocation3 + %s37]]
    %s178 = ssub.s32 %s176, %s177
    %p179 = scmp.eq.s32.totalorder %s178, 0
    %s181 = sadd.s32 %s180, 1
    %s182 = scalar_select %p179, %s180, %s181
    %p185 = pneg %p179
    %p186 = scmp.eq.s32.totalorder %s30, 2
    %p187 = por %p185, %p186
    %p188 = scmp.ne.s32.totalorder %s180, %s183
    %p189 = scmp.eq.s32.totalorder %s30, 0
    %p190 = por %p188, %p189
    %p191 = scmp.ne.s32.totalorder %s180, %s183
    %p192 = scmp.eq.s32.totalorder %s35, 2
    %p193 = por %p191, %p192
    %p194 = scmp.ne.s32.totalorder %s183, %s184
    %p195 = scmp.eq.s32.totalorder %s35, 0
    %p196 = por %p194, %p195
    %p197 = scmp.ne.s32.totalorder %s183, %s184
    %p198 = scmp.eq.s32.totalorder %s36, 2
    %p199 = por %p197, %p198
    %p201 = scmp.ne.s32.totalorder %s184, %s200
    %p202 = scmp.eq.s32.totalorder %s36, 0
    %p203 = por %p201, %p202
    %s204 = sld [smem:[#allocation3 + %s30]]
    %s205 = sld [smem:[#allocation3 + %s37]]
    %s206 = ssub.s32 %s204, %s205
    %p207 = scmp.eq.s32.totalorder %s206, 0
    %s209 = sadd.s32 %s208, 1
    %s210 = scalar_select %p207, %s208, %s209
    %p213 = pneg %p207
    %p214 = scmp.eq.s32.totalorder %s30, 2
    %p215 = por %p213, %p214
    %p216 = scmp.ne.s32.totalorder %s208, %s211
    %p217 = scmp.eq.s32.totalorder %s30, 0
    %p218 = por %p216, %p217
    %p219 = scmp.ne.s32.totalorder %s208, %s211
    %p220 = scmp.eq.s32.totalorder %s35, 2
    %p221 = por %p219, %p220
    %p222 = scmp.ne.s32.totalorder %s211, %s212
    %p223 = scmp.eq.s32.totalorder %s35, 0
    %p224 = por %p222, %p223
    %p225 = scmp.ne.s32.totalorder %s211, %s212
    %p226 = scmp.eq.s32.totalorder %s36, 2
    %p227 = por %p225, %p226
    %p229 = scmp.ne.s32.totalorder %s212, %s228
    %p230 = scmp.eq.s32.totalorder %s36, 0
    %p231 = por %p229, %p230
    %s232 = sld [smem:[#allocation3 + %s30]]
    %s233 = sld [smem:[#allocation3 + %s37]]
    %s234 = ssub.s32 %s232, %s233
    %p235 = scmp.eq.s32.totalorder %s234, 0
    %s237 = sadd.s32 %s236, 1
    %s238 = scalar_select %p235, %s236, %s237
    %p241 = pneg %p235
    %p242 = scmp.eq.s32.totalorder %s30, 2
    %p243 = por %p241, %p242
    %p244 = scmp.ne.s32.totalorder %s236, %s239
    %p245 = scmp.eq.s32.totalorder %s30, 0
    %p246 = por %p244, %p245
    %p247 = scmp.ne.s32.totalorder %s236, %s239
    %p248 = scmp.eq.s32.totalorder %s35, 2
    %p249 = por %p247, %p248
    %p250 = scmp.ne.s32.totalorder %s239, %s240
    %p251 = scmp.eq.s32.totalorder %s35, 0
    %p252 = por %p250, %p251
    %p253 = scmp.ne.s32.totalorder %s239, %s240
    %p254 = scmp.eq.s32.totalorder %s36, 2
    %p255 = por %p253, %p254
    %p257 = scmp.ne.s32.totalorder %s240, %s256
    %p258 = scmp.eq.s32.totalorder %s36, 0
    %p259 = por %p257, %p258
    %s260 = sld [smem:[#allocation3 + %s30]]
    %s261 = sld [smem:[#allocation3 + %s37]]
    %s262 = ssub.s32 %s260, %s261
    %p263 = scmp.eq.s32.totalorder %s262, 0
    %s265 = sadd.s32 %s264, 1
    %s266 = scalar_select %p263, %s264, %s265
    %p269 = pneg %p263
    %p270 = scmp.eq.s32.totalorder %s30, 2
    %p271 = por %p269, %p270
    %p272 = scmp.ne.s32.totalorder %s264, %s267
    %p273 = scmp.eq.s32.totalorder %s30, 0
    %p274 = por %p272, %p273
    %p275 = scmp.ne.s32.totalorder %s264, %s267
    %p276 = scmp.eq.s32.totalorder %s35, 2
    %p277 = por %p275, %p276
    %p278 = scmp.ne.s32.totalorder %s267, %s268
    %p279 = scmp.eq.s32.totalorder %s35, 0
    %p280 = por %p278, %p279
    %p281 = scmp.ne.s32.totalorder %s267, %s268
    %p282 = scmp.eq.s32.totalorder %s36, 2
    %p283 = por %p281, %p282
    %p285 = scmp.ne.s32.totalorder %s268, %s284
    %p286 = scmp.eq.s32.totalorder %s36, 0
    %p287 = por %p285, %p286
    %s288 = ssub.s32 %s30, %s37
    %p289 = scmp.eq.s32.totalorder %s288, 0
    %s291 = sadd.s32 %s290, 1
    %s292 = scalar_select %p289, %s290, %s291
    %p295 = pneg %p289
    %p296 = scmp.eq.s32.totalorder %s30, 2
    %p297 = por %p295, %p296
    %p298 = scmp.ne.s32.totalorder %s290, %s293
    %p299 = scmp.eq.s32.totalorder %s30, 0
    %p300 = por %p298, %p299
    %p301 = scmp.ne.s32.totalorder %s290, %s293
    %p302 = scmp.eq.s32.totalorder %s35, 2
    %p303 = por %p301, %p302
    %p304 = scmp.ne.s32.totalorder %s293, %s294
    %p305 = scmp.eq.s32.totalorder %s35, 0
    %p306 = por %p304, %p305
    %p307 = scmp.ne.s32.totalorder %s293, %s294
    %p308 = scmp.eq.s32.totalorder %s36, 2
    %p309 = por %p307, %p308
    %p311 = scmp.ne.s32.totalorder %s294, %s310
    %p312 = scmp.eq.s32.totalorder %s36, 0
    %p313 = por %p311, %p312
    %p314 = scmp.le.s32.totalorder 1, %s30
    %p315 = scmp.lt.s32.totalorder %s30, 4
    %p316 = pnand %p314, %p315
    %p317 = pneg %p316
    // Predicated region
    $region9: #{fitting_forward.1} parent=5 // pred_check
      _
    $region10: #{fitting_forward.1} parent=5 // pred_check_branch
      %319 = sbr.rel (%p316) target = $region12
    $region11: #{fitting_forward.1} parent=5 // pred_region
      %s320 = ssub.s32 %s30, 1
    $region12: #{fitting_forward.1} parent=5 // pred_fallthru
      _
    %p321 = scmp.lt.s32.totalorder %s30, 3
    // Predicated region
    $region13: #{fitting_forward.1} parent=5 // pred_check
      %p322 = pneg %p321
    $region14: #{fitting_forward.1} parent=5 // pred_check_branch
      %324 = sbr.rel (%p322) target = $region16
    $region15: #{fitting_forward.1} parent=5 // pred_region
      // Predicated region
      $region17: #{fitting_forward.1} parent=15 // pred_check
        %p325 = pneg %p50
      $region18: #{fitting_forward.1} parent=15 // pred_check_branch
        %327 = sbr.rel (%p325) target = $region20
      $region19: #{fitting_forward.1} parent=15 // pred_region
        %p328 = scmp.lt.s32.totalorder %s30, 2
        %s329 = scalar_select %p328, %s30, 2
        %s330 = smul.addr %s329, 32
        %s331 = smul.addr %s330, 8
        %s332 = scalar_lea.vmem %s2, %s331
      $region20: #{fitting_forward.1} parent=15 // pred_fallthru
        _
      // Predicated region
      $region21: #{fitting_forward.1} parent=15 // pred_check
        %p333 = pneg %p78
      $region22: #{fitting_forward.1} parent=15 // pred_check_branch
        %335 = sbr.rel (%p333) target = $region24
      $region23: #{fitting_forward.1} parent=15 // pred_region
        %s336 = sld [smem:[#allocation3 + %s30]]
        %p337 = scmp.lt.s32.totalorder %s336, 1
        %s338 = scalar_select %p337, %s336, 1
        %s339 = smul.addr %s338, 16
        %s340 = smul.addr %s339, 8
        %s341 = scalar_lea.vmem %s3, %s340
        %s342 = sld [smem:[#allocation3 + %s30]]
      $region24: #{fitting_forward.1} parent=15 // pred_fallthru
        _
      // Predicated region
      $region25: #{fitting_forward.1} parent=15 // pred_check
        %p343 = pneg %p106
      $region26: #{fitting_forward.1} parent=15 // pred_check_branch
        %345 = sbr.rel (%p343) target = $region28
      $region27: #{fitting_forward.1} parent=15 // pred_region
        %s346 = sld [smem:[#allocation3 + %s30]]
        %p347 = scmp.lt.s32.totalorder %s346, 1
        %s348 = scalar_select %p347, %s346, 1
        %s349 = smul.addr %s348, 2
        %s350 = scalar_lea.vmem %s4, %s349
        %s351 = sld [smem:[#allocation3 + %s30]]
      $region28: #{fitting_forward.1} parent=15 // pred_fallthru
        _
      // Predicated region
      $region29: #{fitting_forward.1} parent=15 // pred_check
        %p352 = pneg %p134
      $region30: #{fitting_forward.1} parent=15 // pred_check_branch
        %354 = sbr.rel (%p352) target = $region32
      $region31: #{fitting_forward.1} parent=15 // pred_region
        %s355 = sld [smem:[#allocation3 + %s30]]
        %p356 = scmp.lt.s32.totalorder %s355, 1
        %s357 = scalar_select %p356, %s355, 1
        %s358 = smul.addr %s357, 64
        %s359 = smul.addr %s358, 8
        %s360 = scalar_lea.vmem %s5, %s359
        %s361 = sld [smem:[#allocation3 + %s30]]
      $region32: #{fitting_forward.1} parent=15 // pred_fallthru
        _
      // Predicated region
      $region33: #{fitting_forward.1} parent=15 // pred_check
        %p362 = pneg %p162
      $region34: #{fitting_forward.1} parent=15 // pred_check_branch
        %364 = sbr.rel (%p362) target = $region36
      $region35: #{fitting_forward.1} parent=15 // pred_region
        %s365 = sld [smem:[#allocation3 + %s30]]
        %p366 = scmp.lt.s32.totalorder %s365, 1
        %s367 = scalar_select %p366, %s365, 1
        %s368 = smul.addr %s367, 2
        %s369 = scalar_lea.vmem %s6, %s368
        %s370 = sld [smem:[#allocation3 + %s30]]
      $region36: #{fitting_forward.1} parent=15 // pred_fallthru
        _
      // Predicated region
      $region37: #{fitting_forward.1} parent=15 // pred_check
        %p371 = pneg %p190
      $region38: #{fitting_forward.1} parent=15 // pred_check_branch
        %373 = sbr.rel (%p371) target = $region40
      $region39: #{fitting_forward.1} parent=15 // pred_region
        %s374 = sld [smem:[#allocation3 + %s30]]
        %p375 = scmp.lt.s32.totalorder %s374, 1
        %s376 = scalar_select %p375, %s374, 1
        %s377 = smul.addr %s376, 64
        %s378 = smul.addr %s377, 8
        %s379 = scalar_lea.vmem %s7, %s378
        %s380 = sld [smem:[#allocation3 + %s30]]
      $region40: #{fitting_forward.1} parent=15 // pred_fallthru
        _
      // Predicated region
      $region41: #{fitting_forward.1} parent=15 // pred_check
        %p381 = pneg %p218
      $region42: #{fitting_forward.1} parent=15 // pred_check_branch
        %383 = sbr.rel (%p381) target = $region44
      $region43: #{fitting_forward.1} parent=15 // pred_region
        %s384 = sld [smem:[#allocation3 + %s30]]
        %p385 = scmp.lt.s32.totalorder %s384, 1
        %s386 = scalar_select %p385, %s384, 1
        %s387 = smul.addr %s386, 2
        %s388 = scalar_lea.vmem %s8, %s387
        %s389 = sld [smem:[#allocation3 + %s30]]
      $region44: #{fitting_forward.1} parent=15 // pred_fallthru
        _
      // Predicated region
      $region45: #{fitting_forward.1} parent=15 // pred_check
        %p390 = pneg %p246
      $region46: #{fitting_forward.1} parent=15 // pred_check_branch
        %392 = sbr.rel (%p390) target = $region48
      $region47: #{fitting_forward.1} parent=15 // pred_region
        %s393 = sld [smem:[#allocation3 + %s30]]
        %p394 = scmp.lt.s32.totalorder %s393, 1
        %s395 = scalar_select %p394, %s393, 1
        %s396 = smul.addr %s395, 2
        %s397 = scalar_lea.vmem %s9, %s396
        %s398 = sld [smem:[#allocation3 + %s30]]
      $region48: #{fitting_forward.1} parent=15 // pred_fallthru
        _
      // Predicated region
      $region49: #{fitting_forward.1} parent=15 // pred_check
        %p399 = pneg %p274
      $region50: #{fitting_forward.1} parent=15 // pred_check_branch
        %401 = sbr.rel (%p399) target = $region52
      $region51: #{fitting_forward.1} parent=15 // pred_region
        %s402 = sld [smem:[#allocation3 + %s30]]
        %p403 = scmp.lt.s32.totalorder %s402, 1
        %s404 = scalar_select %p403, %s402, 1
        %s405 = scalar_lea.vmem %s10, %s404
        %s406 = sld [smem:[#allocation3 + %s30]]
      $region52: #{fitting_forward.1} parent=15 // pred_fallthru
        _
    $region16: #{fitting_forward.1} parent=5 // pred_fallthru
      _
    %p407 = scmp.le.s32.totalorder 1, %s30
    %p408 = scmp.lt.s32.totalorder %s30, 4
    %p409 = pnand %p407, %p408
    %p410 = pneg %p409
    // Predicated region
    $region53: #{fitting_forward.1} parent=5 // pred_check
      _
    $region54: #{fitting_forward.1} parent=5 // pred_check_branch
      %412 = sbr.rel (%p409) target = $region56
    $region55: #{fitting_forward.1} parent=5 // pred_region
      %s413 = ssub.s32 %s30, 1
      %p414 = scmp.lt.s32.totalorder %s35, 2
      %s415 = scalar_select %p414, %s35, 2
      %s416 = smul.addr %s415, 32
      %s417 = smul.addr %s416, 8
      %s418 = scalar_lea.vmem %s2, %s417
      %p419 = pneg %p56
      %p420 = pneg %p53
      %s421 = sld [smem:[#allocation3 + %s35]]
      %p422 = scmp.lt.s32.totalorder %s421, 1
      %s423 = scalar_select %p422, %s421, 1
      %s424 = smul.addr %s423, 16
      %s425 = smul.addr %s424, 8
      %s426 = scalar_lea.vmem %s3, %s425
      %p427 = pneg %p84
      %p428 = pneg %p81
      %s429 = sld [smem:[#allocation3 + %s35]]
      %p430 = scmp.lt.s32.totalorder %s429, 1
      %s431 = scalar_select %p430, %s429, 1
      %s432 = smul.addr %s431, 2
      %s433 = scalar_lea.vmem %s4, %s432
      %p434 = pneg %p112
      %p435 = pneg %p109
      %s436 = sld [smem:[#allocation3 + %s35]]
      %p437 = scmp.lt.s32.totalorder %s436, 1
      %s438 = scalar_select %p437, %s436, 1
      %s439 = smul.addr %s438, 64
      %s440 = smul.addr %s439, 8
      %s441 = scalar_lea.vmem %s5, %s440
      %p442 = pneg %p140
      %p443 = pneg %p137
      %s444 = sld [smem:[#allocation3 + %s35]]
      %p445 = scmp.lt.s32.totalorder %s444, 1
      %s446 = scalar_select %p445, %s444, 1
      %s447 = smul.addr %s446, 2
      %s448 = scalar_lea.vmem %s6, %s447
      %p449 = pneg %p168
      %p450 = pneg %p165
      %s451 = sld [smem:[#allocation3 + %s35]]
      %p452 = scmp.lt.s32.totalorder %s451, 1
      %s453 = scalar_select %p452, %s451, 1
      %s454 = smul.addr %s453, 64
      %s455 = smul.addr %s454, 8
      %s456 = scalar_lea.vmem %s7, %s455
      %p457 = pneg %p196
      %p458 = pneg %p193
      %s459 = sld [smem:[#allocation3 + %s35]]
      %p460 = scmp.lt.s32.totalorder %s459, 1
      %s461 = scalar_select %p460, %s459, 1
      %s462 = smul.addr %s461, 2
      %s463 = scalar_lea.vmem %s8, %s462
      %p464 = pneg %p224
      %p465 = pneg %p221
      %s466 = sld [smem:[#allocation3 + %s35]]
      %p467 = scmp.lt.s32.totalorder %s466, 1
      %s468 = scalar_select %p467, %s466, 1
      %s469 = smul.addr %s468, 2
      %s470 = scalar_lea.vmem %s9, %s469
      %p471 = pneg %p252
      %p472 = pneg %p249
      %s473 = sld [smem:[#allocation3 + %s35]]
      %p474 = scmp.lt.s32.totalorder %s473, 1
      %s475 = scalar_select %p474, %s473, 1
      %s476 = scalar_lea.vmem %s10, %s475
      %p477 = pneg %p280
      %p478 = pneg %p277
      %p479 = pneg %p306
      %p480 = pneg %p303
      %p481 = scmp.lt.s32.totalorder %s35, 2
      %s482 = scalar_select %p481, %s35, 2
      %s483 = smul.addr %s482, 2
      %s484 = scalar_lea.vmem %s11, %s483
      %p485 = scmp.lt.s32.totalorder %s35, 2
      %s486 = scalar_select %p485, %s35, 2
      %s487 = smul.addr %s486, 32
      %s488 = smul.addr %s487, 8
      %s489 = scalar_lea.vmem %s2, %s488
      %s490 = sld [smem:[#allocation3 + %s35]]
      %p491 = scmp.lt.s32.totalorder %s490, 1
      %s492 = scalar_select %p491, %s490, 1
      %s493 = smul.addr %s492, 16
      %s494 = smul.addr %s493, 8
      %s495 = scalar_lea.vmem %s3, %s494
      %s496 = sld [smem:[#allocation3 + %s35]]
      %s497 = sld [smem:[#allocation3 + %s35]]
      %p498 = scmp.lt.s32.totalorder %s497, 1
      %s499 = scalar_select %p498, %s497, 1
      %s500 = smul.addr %s499, 2
      %s501 = scalar_lea.vmem %s4, %s500
      %s502 = sld [smem:[#allocation3 + %s35]]
      %s503 = sld [smem:[#allocation3 + %s35]]
      %p504 = scmp.lt.s32.totalorder %s503, 1
      %s505 = scalar_select %p504, %s503, 1
      %s506 = smul.addr %s505, 64
      %s507 = smul.addr %s506, 8
      %s508 = scalar_lea.vmem %s5, %s507
      %s509 = sld [smem:[#allocation3 + %s35]]
      %s510 = sld [smem:[#allocation3 + %s35]]
      %p511 = scmp.lt.s32.totalorder %s510, 1
      %s512 = scalar_select %p511, %s510, 1
      %s513 = smul.addr %s512, 2
      %s514 = scalar_lea.vmem %s6, %s513
      %s515 = sld [smem:[#allocation3 + %s35]]
      %s516 = sld [smem:[#allocation3 + %s35]]
      %p517 = scmp.lt.s32.totalorder %s516, 1
      %s518 = scalar_select %p517, %s516, 1
      %s519 = smul.addr %s518, 64
      %s520 = smul.addr %s519, 8
      %s521 = scalar_lea.vmem %s7, %s520
      %s522 = sld [smem:[#allocation3 + %s35]]
      %s523 = sld [smem:[#allocation3 + %s35]]
      %p524 = scmp.lt.s32.totalorder %s523, 1
      %s525 = scalar_select %p524, %s523, 1
      %s526 = smul.addr %s525, 2
      %s527 = scalar_lea.vmem %s8, %s526
      %s528 = sld [smem:[#allocation3 + %s35]]
      %s529 = sld [smem:[#allocation3 + %s35]]
      %p530 = scmp.lt.s32.totalorder %s529, 1
      %s531 = scalar_select %p530, %s529, 1
      %s532 = smul.addr %s531, 2
      %s533 = scalar_lea.vmem %s9, %s532
      %s534 = sld [smem:[#allocation3 + %s35]]
      %s535 = sld [smem:[#allocation3 + %s35]]
      %p536 = scmp.lt.s32.totalorder %s535, 1
      %s537 = scalar_select %p536, %s535, 1
      %s538 = scalar_lea.vmem %s10, %s537
      %s539 = sld [smem:[#allocation3 + %s35]]
      %p540 = scmp.lt.s32.totalorder %s35, 2
      %s541 = scalar_select %p540, %s35, 2
      %s542 = smul.addr %s541, 2
      %s543 = scalar_lea.vmem %s11, %s542
      %s544 = sld [smem:[#allocation4 + %s35]]
      %p545 = scmp.ne.s32.totalorder %s544, 0
      // Predicated region
      $region57: #{fitting_forward.1} parent=55 // pred_check
        %p546 = pneg %p545
      $region58: #{fitting_forward.1} parent=55 // pred_check_branch
        %548 = sbr.rel (%p546) target = $region60
      $region59: #{fitting_forward.1} parent=55 // pred_region
        %v549 = vld [vmem:[%s489] sm:$0xff]
        %v550 = vld [vmem:[%s489 + $0x8] sm:$0xff]
        %v551 = vld [vmem:[%s489 + $0x10] sm:$0xff]
        %v552 = vld [vmem:[%s489 + $0x18] sm:$0xff]
        %v553 = vld [vmem:[%s489 + $0x20] sm:$0xff]
        %v554 = vld [vmem:[%s489 + $0x28] sm:$0xff]
        %v555 = vld [vmem:[%s489 + $0x30] sm:$0xff]
        %v556 = vld [vmem:[%s489 + $0x38] sm:$0xff]
        %v557 = vld [vmem:[%s489 + $0x40] sm:$0xff]
        %v558 = vld [vmem:[%s489 + $0x48] sm:$0xff]
        %v559 = vld [vmem:[%s489 + $0x50] sm:$0xff]
        %v560 = vld [vmem:[%s489 + $0x58] sm:$0xff]
        %v561 = vld [vmem:[%s489 + $0x60] sm:$0xff]
        %v562 = vld [vmem:[%s489 + $0x68] sm:$0xff]
        %v563 = vld [vmem:[%s489 + $0x70] sm:$0xff]
        %v564 = vld [vmem:[%s489 + $0x78] sm:$0xff]
        %v565 = vld [vmem:[%s489 + $0x80] sm:$0xff]
        %v566 = vld [vmem:[%s489 + $0x88] sm:$0xff]
        %v567 = vld [vmem:[%s489 + $0x90] sm:$0xff]
        %v568 = vld [vmem:[%s489 + $0x98] sm:$0xff]
        %v569 = vld [vmem:[%s489 + $0xa0] sm:$0xff]
        %v570 = vld [vmem:[%s489 + $0xa8] sm:$0xff]
        %v571 = vld [vmem:[%s489 + $0xb0] sm:$0xff]
        %v572 = vld [vmem:[%s489 + $0xb8] sm:$0xff]
        %v573 = vld [vmem:[%s489 + $0xc0] sm:$0xff]
        %v574 = vld [vmem:[%s489 + $0xc8] sm:$0xff]
        %v575 = vld [vmem:[%s489 + $0xd0] sm:$0xff]
        %v576 = vld [vmem:[%s489 + $0xd8] sm:$0xff]
        %v577 = vld [vmem:[%s489 + $0xe0] sm:$0xff]
        %v578 = vld [vmem:[%s489 + $0xe8] sm:$0xff]
        %v579 = vld [vmem:[%s489 + $0xf0] sm:$0xff]
        %v580 = vld [vmem:[%s489 + $0xf8] sm:$0xff]
        %v581 = vld [vmem:[%s495] sm:$0xff]
        %v582 = vld [vmem:[%s495 + $0x8] sm:$0xff]
        %v583 = vld [vmem:[%s495 + $0x10] sm:$0xff]
        %v584 = vld [vmem:[%s495 + $0x18] sm:$0xff]
        %v585 = vld [vmem:[%s495 + $0x20] sm:$0xff]
        %v586 = vld [vmem:[%s495 + $0x28] sm:$0xff]
        %v587 = vld [vmem:[%s495 + $0x30] sm:$0xff]
        %v588 = vld [vmem:[%s495 + $0x38] sm:$0xff]
        %v589 = vld [vmem:[%s495 + $0x40] sm:$0xff]
        %v590 = vld [vmem:[%s495 + $0x48] sm:$0xff]
        %v591 = vld [vmem:[%s495 + $0x50] sm:$0xff]
        %v592 = vld [vmem:[%s495 + $0x58] sm:$0xff]
        %v593 = vld [vmem:[%s495 + $0x60] sm:$0xff]
        %v594 = vld [vmem:[%s495 + $0x68] sm:$0xff]
        %v595 = vld [vmem:[%s495 + $0x70] sm:$0xff]
        %v596 = vld [vmem:[%s495 + $0x78] sm:$0xff]
        %v597 = vld [vmem:[%s501] sm:$0x3]
        %v599 = vperm.slane %v597, 0
        %v600 = vperm.slane %v597, 1
        %vm603 = vcmask 523264
        %v605 = vsel %vm603, %v549, 0
        %v608 = vsel %vm603, %v550, 0
        %v611 = vsel %vm603, %v551, 0
        %v614 = vsel %vm603, %v552, 0
        %v617 = vsel %vm603, %v553, 0
        %v620 = vsel %vm603, %v554, 0
        %v623 = vsel %vm603, %v555, 0
        %v626 = vsel %vm603, %v556, 0
        %v629 = vsel %vm603, %v557, 0
        %v632 = vsel %vm603, %v558, 0
        %v635 = vsel %vm603, %v559, 0
        %v638 = vsel %vm603, %v560, 0
        %v641 = vsel %vm603, %v561, 0
        %v644 = vsel %vm603, %v562, 0
        %v647 = vsel %vm603, %v563, 0
        %v650 = vsel %vm603, %v564, 0
        %v653 = vsel %vm603, %v565, 0
        %v656 = vsel %vm603, %v566, 0
        %v659 = vsel %vm603, %v567, 0
        %v662 = vsel %vm603, %v568, 0
        %v665 = vsel %vm603, %v569, 0
        %v668 = vsel %vm603, %v570, 0
        %v671 = vsel %vm603, %v571, 0
        %v674 = vsel %vm603, %v572, 0
        %v677 = vsel %vm603, %v573, 0
        %v680 = vsel %vm603, %v574, 0
        %v683 = vsel %vm603, %v575, 0
        %v686 = vsel %vm603, %v576, 0
        %v689 = vsel %vm603, %v577, 0
        %v692 = vsel %vm603, %v578, 0
        %v695 = vsel %vm603, %v579, 0
        %v698 = vsel %vm603, %v580, 0
        %700 = vmatpush.msra.mxu0 0.0
        %701 = vmatpush.msra.mxu0 0.0
        %702 = vmatpush.msra.mxu0 0.0
        %703 = vmatpush.msra.mxu0 0.0
        %704 = vmatpush.msra.mxu0 0.0
        %705 = vmatpush.msra.mxu0 0.0
        %706 = vmatpush.msra.mxu0 0.0
        %707 = vmatpush.msra.mxu0 0.0
        %708 = vmatpush.msra.mxu0 %v595
        %709 = vmatpush.msra.mxu0 %v593
        %710 = vmatpush.msra.mxu0 %v591
        %711 = vmatpush.msra.mxu0 %v589
        %712 = vmatpush.msra.mxu0 %v587
        %713 = vmatpush.msra.mxu0 %v585
        %714 = vmatpush.msra.mxu0 %v583
        %715 = vmatpush.msra.mxu0 %v581
        %716 = vmatmul.f32.gmra.mxu0 %v605
        %v717 = vpop.f32.mrf.mxu0
        %v718 = vadd.f32 %v599, %v717
        %719 = vmatmul.f32.gmra.mxu0 %v608
        %v720 = vpop.f32.mrf.mxu0
        %v721 = vadd.f32 %v599, %v720
        %722 = vmatmul.f32.gmra.mxu0 %v611
        %v723 = vpop.f32.mrf.mxu0
        %v724 = vadd.f32 %v599, %v723
        %725 = vmatmul.f32.gmra.mxu0 %v614
        %v726 = vpop.f32.mrf.mxu0
        %v727 = vadd.f32 %v599, %v726
        %728 = vmatmul.f32.gmra.mxu0 %v617
        %v729 = vpop.f32.mrf.mxu0
        %v730 = vadd.f32 %v599, %v729
        %731 = vmatmul.f32.gmra.mxu0 %v620
        %v732 = vpop.f32.mrf.mxu0
        %v733 = vadd.f32 %v599, %v732
        %734 = vmatmul.f32.gmra.mxu0 %v623
        %v735 = vpop.f32.mrf.mxu0
        %v736 = vadd.f32 %v599, %v735
        %737 = vmatmul.f32.gmra.mxu0 %v626
        %v738 = vpop.f32.mrf.mxu0
        %v739 = vadd.f32 %v599, %v738
        %740 = vmatmul.f32.gmra.mxu0 %v629
        %v741 = vpop.f32.mrf.mxu0
        %v742 = vadd.f32 %v599, %v741
        %743 = vmatmul.f32.gmra.mxu0 %v632
        %v744 = vpop.f32.mrf.mxu0
        %v745 = vadd.f32 %v599, %v744
        %746 = vmatmul.f32.gmra.mxu0 %v635
        %v747 = vpop.f32.mrf.mxu0
        %v748 = vadd.f32 %v599, %v747
        %749 = vmatmul.f32.gmra.mxu0 %v638
        %v750 = vpop.f32.mrf.mxu0
        %v751 = vadd.f32 %v599, %v750
        %752 = vmatmul.f32.gmra.mxu0 %v641
        %v753 = vpop.f32.mrf.mxu0
        %v754 = vadd.f32 %v599, %v753
        %755 = vmatmul.f32.gmra.mxu0 %v644
        %v756 = vpop.f32.mrf.mxu0
        %v757 = vadd.f32 %v599, %v756
        %758 = vmatmul.f32.gmra.mxu0 %v647
        %v759 = vpop.f32.mrf.mxu0
        %v760 = vadd.f32 %v599, %v759
        %761 = vmatmul.f32.gmra.mxu0 %v650
        %v762 = vpop.f32.mrf.mxu0
        %v763 = vadd.f32 %v599, %v762
        %764 = vmatmul.f32.gmra.mxu0 %v653
        %v765 = vpop.f32.mrf.mxu0
        %v766 = vadd.f32 %v599, %v765
        %767 = vmatmul.f32.gmra.mxu0 %v656
        %v768 = vpop.f32.mrf.mxu0
        %v769 = vadd.f32 %v599, %v768
        %770 = vmatmul.f32.gmra.mxu0 %v659
        %v771 = vpop.f32.mrf.mxu0
        %v772 = vadd.f32 %v599, %v771
        %773 = vmatmul.f32.gmra.mxu0 %v662
        %v774 = vpop.f32.mrf.mxu0
        %v775 = vadd.f32 %v599, %v774
        %776 = vmatmul.f32.gmra.mxu0 %v665
        %v777 = vpop.f32.mrf.mxu0
        %v778 = vadd.f32 %v599, %v777
        %779 = vmatmul.f32.gmra.mxu0 %v668
        %v780 = vpop.f32.mrf.mxu0
        %v781 = vadd.f32 %v599, %v780
        %782 = vmatmul.f32.gmra.mxu0 %v671
        %v783 = vpop.f32.mrf.mxu0
        %v784 = vadd.f32 %v599, %v783
        %785 = vmatmul.f32.gmra.mxu0 %v674
        %v786 = vpop.f32.mrf.mxu0
        %v787 = vadd.f32 %v599, %v786
        %788 = vmatmul.f32.gmra.mxu0 %v677
        %v789 = vpop.f32.mrf.mxu0
        %v790 = vadd.f32 %v599, %v789
        %791 = vmatmul.f32.gmra.mxu0 %v680
        %v792 = vpop.f32.mrf.mxu0
        %v793 = vadd.f32 %v599, %v792
        %794 = vmatmul.f32.gmra.mxu0 %v683
        %v795 = vpop.f32.mrf.mxu0
        %v796 = vadd.f32 %v599, %v795
        %797 = vmatmul.f32.gmra.mxu0 %v686
        %v798 = vpop.f32.mrf.mxu0
        %v799 = vadd.f32 %v599, %v798
        %800 = vmatmul.f32.gmra.mxu0 %v689
        %v801 = vpop.f32.mrf.mxu0
        %v802 = vadd.f32 %v599, %v801
        %803 = vmatmul.f32.gmra.mxu0 %v692
        %v804 = vpop.f32.mrf.mxu0
        %v805 = vadd.f32 %v599, %v804
        %806 = vmatmul.f32.gmra.mxu0 %v695
        %v807 = vpop.f32.mrf.mxu0
        %v808 = vadd.f32 %v599, %v807
        %809 = vmatmul.f32.gmra.mxu0 %v698
        %v810 = vpop.f32.mrf.mxu0
        %v811 = vadd.f32 %v599, %v810
        %812 = vdwg.mxu0
        %813 = vmatpush.msra.mxu0 0.0
        %814 = vmatpush.msra.mxu0 0.0
        %815 = vmatpush.msra.mxu0 0.0
        %816 = vmatpush.msra.mxu0 0.0
        %817 = vmatpush.msra.mxu0 0.0
        %818 = vmatpush.msra.mxu0 0.0
        %819 = vmatpush.msra.mxu0 0.0
        %820 = vmatpush.msra.mxu0 0.0
        %821 = vmatpush.msra.mxu0 %v596
        %822 = vmatpush.msra.mxu0 %v594
        %823 = vmatpush.msra.mxu0 %v592
        %824 = vmatpush.msra.mxu0 %v590
        %825 = vmatpush.msra.mxu0 %v588
        %826 = vmatpush.msra.mxu0 %v586
        %827 = vmatpush.msra.mxu0 %v584
        %828 = vmatpush.msra.mxu0 %v582
        %829 = vmatmul.f32.gmra.mxu0 %v605
        %v830 = vpop.f32.mrf.mxu0
        %v831 = vadd.f32 %v600, %v830
        %832 = vmatmul.f32.gmra.mxu0 %v608
        %v833 = vpop.f32.mrf.mxu0
        %v834 = vadd.f32 %v600, %v833
        %835 = vmatmul.f32.gmra.mxu0 %v611
        %v836 = vpop.f32.mrf.mxu0
        %v837 = vadd.f32 %v600, %v836
        %838 = vmatmul.f32.gmra.mxu0 %v614
        %v839 = vpop.f32.mrf.mxu0
        %v840 = vadd.f32 %v600, %v839
        %841 = vmatmul.f32.gmra.mxu0 %v617
        %v842 = vpop.f32.mrf.mxu0
        %v843 = vadd.f32 %v600, %v842
        %844 = vmatmul.f32.gmra.mxu0 %v620
        %v845 = vpop.f32.mrf.mxu0
        %v846 = vadd.f32 %v600, %v845
        %847 = vmatmul.f32.gmra.mxu0 %v623
        %v848 = vpop.f32.mrf.mxu0
        %v849 = vadd.f32 %v600, %v848
        %850 = vmatmul.f32.gmra.mxu0 %v626
        %v851 = vpop.f32.mrf.mxu0
        %v852 = vadd.f32 %v600, %v851
        %853 = vmatmul.f32.gmra.mxu0 %v629
        %v854 = vpop.f32.mrf.mxu0
        %v855 = vadd.f32 %v600, %v854
        %856 = vmatmul.f32.gmra.mxu0 %v632
        %v857 = vpop.f32.mrf.mxu0
        %v858 = vadd.f32 %v600, %v857
        %859 = vmatmul.f32.gmra.mxu0 %v635
        %v860 = vpop.f32.mrf.mxu0
        %v861 = vadd.f32 %v600, %v860
        %862 = vmatmul.f32.gmra.mxu0 %v638
        %v863 = vpop.f32.mrf.mxu0
        %v864 = vadd.f32 %v600, %v863
        %865 = vmatmul.f32.gmra.mxu0 %v641
        %v866 = vpop.f32.mrf.mxu0
        %v867 = vadd.f32 %v600, %v866
        %868 = vmatmul.f32.gmra.mxu0 %v644
        %v869 = vpop.f32.mrf.mxu0
        %v870 = vadd.f32 %v600, %v869
        %871 = vmatmul.f32.gmra.mxu0 %v647
        %v872 = vpop.f32.mrf.mxu0
        %v873 = vadd.f32 %v600, %v872
        %874 = vmatmul.f32.gmra.mxu0 %v650
        %v875 = vpop.f32.mrf.mxu0
        %v876 = vadd.f32 %v600, %v875
        %877 = vmatmul.f32.gmra.mxu0 %v653
        %v878 = vpop.f32.mrf.mxu0
        %v879 = vadd.f32 %v600, %v878
        %880 = vmatmul.f32.gmra.mxu0 %v656
        %v881 = vpop.f32.mrf.mxu0
        %v882 = vadd.f32 %v600, %v881
        %883 = vmatmul.f32.gmra.mxu0 %v659
        %v884 = vpop.f32.mrf.mxu0
        %v885 = vadd.f32 %v600, %v884
        %886 = vmatmul.f32.gmra.mxu0 %v662
        %v887 = vpop.f32.mrf.mxu0
        %v888 = vadd.f32 %v600, %v887
        %889 = vmatmul.f32.gmra.mxu0 %v665
        %v890 = vpop.f32.mrf.mxu0
        %v891 = vadd.f32 %v600, %v890
        %892 = vmatmul.f32.gmra.mxu0 %v668
        %v893 = vpop.f32.mrf.mxu0
        %v894 = vadd.f32 %v600, %v893
        %895 = vmatmul.f32.gmra.mxu0 %v671
        %v896 = vpop.f32.mrf.mxu0
        %v897 = vadd.f32 %v600, %v896
        %898 = vmatmul.f32.gmra.mxu0 %v674
        %v899 = vpop.f32.mrf.mxu0
        %v900 = vadd.f32 %v600, %v899
        %901 = vmatmul.f32.gmra.mxu0 %v677
        %v902 = vpop.f32.mrf.mxu0
        %v903 = vadd.f32 %v600, %v902
        %904 = vmatmul.f32.gmra.mxu0 %v680
        %v905 = vpop.f32.mrf.mxu0
        %v906 = vadd.f32 %v600, %v905
        %907 = vmatmul.f32.gmra.mxu0 %v683
        %v908 = vpop.f32.mrf.mxu0
        %v909 = vadd.f32 %v600, %v908
        %910 = vmatmul.f32.gmra.mxu0 %v686
        %v911 = vpop.f32.mrf.mxu0
        %v912 = vadd.f32 %v600, %v911
        %913 = vmatmul.f32.gmra.mxu0 %v689
        %v914 = vpop.f32.mrf.mxu0
        %v915 = vadd.f32 %v600, %v914
        %916 = vmatmul.f32.gmra.mxu0 %v692
        %v917 = vpop.f32.mrf.mxu0
        %v918 = vadd.f32 %v600, %v917
        %919 = vmatmul.f32.gmra.mxu0 %v695
        %v920 = vpop.f32.mrf.mxu0
        %v921 = vadd.f32 %v600, %v920
        %922 = vmatmul.f32.gmra.mxu0 %v698
        %v923 = vpop.f32.mrf.mxu0
        %v924 = vadd.f32 %v600, %v923
        %925 = vdwg.mxu0
        %v926 = vtanh.pop %v718
        %v927 = vtanh.pop %v831
        %v928 = vtanh.pop %v721
        %v929 = vtanh.pop %v834
        %v930 = vtanh.pop %v724
        %v931 = vtanh.pop %v837
        %v932 = vtanh.pop %v727
        %v933 = vtanh.pop %v840
        %v934 = vtanh.pop %v730
        %v935 = vtanh.pop %v843
        %v936 = vtanh.pop %v733
        %v937 = vtanh.pop %v846
        %v938 = vtanh.pop %v736
        %v939 = vtanh.pop %v849
        %v940 = vtanh.pop %v739
        %v941 = vtanh.pop %v852
        %v942 = vtanh.pop %v742
        %v943 = vtanh.pop %v855
        %v944 = vtanh.pop %v745
        %v945 = vtanh.pop %v858
        %v946 = vtanh.pop %v748
        %v947 = vtanh.pop %v861
        %v948 = vtanh.pop %v751
        %v949 = vtanh.pop %v864
        %v950 = vtanh.pop %v754
        %v951 = vtanh.pop %v867
        %v952 = vtanh.pop %v757
        %v953 = vtanh.pop %v870
        %v954 = vtanh.pop %v760
        %v955 = vtanh.pop %v873
        %v956 = vtanh.pop %v763
        %v957 = vtanh.pop %v876
        %v958 = vtanh.pop %v766
        %v959 = vtanh.pop %v879
        %v960 = vtanh.pop %v769
        %v961 = vtanh.pop %v882
        %v962 = vtanh.pop %v772
        %v963 = vtanh.pop %v885
        %v964 = vtanh.pop %v775
        %v965 = vtanh.pop %v888
        %v966 = vtanh.pop %v778
        %v967 = vtanh.pop %v891
        %v968 = vtanh.pop %v781
        %v969 = vtanh.pop %v894
        %v970 = vtanh.pop %v784
        %v971 = vtanh.pop %v897
        %v972 = vtanh.pop %v787
        %v973 = vtanh.pop %v900
        %v974 = vtanh.pop %v790
        %v975 = vtanh.pop %v903
        %v976 = vtanh.pop %v793
        %v977 = vtanh.pop %v906
        %v978 = vtanh.pop %v796
        %v979 = vtanh.pop %v909
        %v980 = vtanh.pop %v799
        %v981 = vtanh.pop %v912
        %v982 = vtanh.pop %v802
        %v983 = vtanh.pop %v915
        %v984 = vtanh.pop %v805
        %v985 = vtanh.pop %v918
        %v986 = vtanh.pop %v808
        %v987 = vtanh.pop %v921
        %v988 = vtanh.pop %v811
        %v989 = vtanh.pop %v924
        %v990 = vld [vmem:[%s508] sm:$0xff]
        %v991 = vld [vmem:[%s508 + $0x8] sm:$0xff]
        %v992 = vld [vmem:[%s508 + $0x10] sm:$0xff]
        %v993 = vld [vmem:[%s508 + $0x18] sm:$0xff]
        %v994 = vld [vmem:[%s508 + $0x20] sm:$0xff]
        %v995 = vld [vmem:[%s508 + $0x28] sm:$0xff]
        %v996 = vld [vmem:[%s508 + $0x30] sm:$0xff]
        %v997 = vld [vmem:[%s508 + $0x38] sm:$0xff]
        %v998 = vld [vmem:[%s508 + $0x40] sm:$0xff]
        %v999 = vld [vmem:[%s508 + $0x48] sm:$0xff]
        %v1000 = vld [vmem:[%s508 + $0x50] sm:$0xff]
        %v1001 = vld [vmem:[%s508 + $0x58] sm:$0xff]
        %v1002 = vld [vmem:[%s508 + $0x60] sm:$0xff]
        %v1003 = vld [vmem:[%s508 + $0x68] sm:$0xff]
        %v1004 = vld [vmem:[%s508 + $0x70] sm:$0xff]
        %v1005 = vld [vmem:[%s508 + $0x78] sm:$0xff]
        %v1006 = vld [vmem:[%s508 + $0x80] sm:$0xff]
        %v1007 = vld [vmem:[%s508 + $0x88] sm:$0xff]
        %v1008 = vld [vmem:[%s508 + $0x90] sm:$0xff]
        %v1009 = vld [vmem:[%s508 + $0x98] sm:$0xff]
        %v1010 = vld [vmem:[%s508 + $0xa0] sm:$0xff]
        %v1011 = vld [vmem:[%s508 + $0xa8] sm:$0xff]
        %v1012 = vld [vmem:[%s508 + $0xb0] sm:$0xff]
        %v1013 = vld [vmem:[%s508 + $0xb8] sm:$0xff]
        %v1014 = vld [vmem:[%s508 + $0xc0] sm:$0xff]
        %v1015 = vld [vmem:[%s508 + $0xc8] sm:$0xff]
        %v1016 = vld [vmem:[%s508 + $0xd0] sm:$0xff]
        %v1017 = vld [vmem:[%s508 + $0xd8] sm:$0xff]
        %v1018 = vld [vmem:[%s508 + $0xe0] sm:$0xff]
        %v1019 = vld [vmem:[%s508 + $0xe8] sm:$0xff]
        %v1020 = vld [vmem:[%s508 + $0xf0] sm:$0xff]
        %v1021 = vld [vmem:[%s508 + $0xf8] sm:$0xff]
        %v1022 = vld [vmem:[%s508 + $0x100] sm:$0xff]
        %v1023 = vld [vmem:[%s508 + $0x108] sm:$0xff]
        %v1024 = vld [vmem:[%s508 + $0x110] sm:$0xff]
        %v1025 = vld [vmem:[%s508 + $0x118] sm:$0xff]
        %v1026 = vld [vmem:[%s508 + $0x120] sm:$0xff]
        %v1027 = vld [vmem:[%s508 + $0x128] sm:$0xff]
        %v1028 = vld [vmem:[%s508 + $0x130] sm:$0xff]
        %v1029 = vld [vmem:[%s508 + $0x138] sm:$0xff]
        %v1030 = vld [vmem:[%s508 + $0x140] sm:$0xff]
        %v1031 = vld [vmem:[%s508 + $0x148] sm:$0xff]
        %v1032 = vld [vmem:[%s508 + $0x150] sm:$0xff]
        %v1033 = vld [vmem:[%s508 + $0x158] sm:$0xff]
        %v1034 = vld [vmem:[%s508 + $0x160] sm:$0xff]
        %v1035 = vld [vmem:[%s508 + $0x168] sm:$0xff]
        %v1036 = vld [vmem:[%s508 + $0x170] sm:$0xff]
        %v1037 = vld [vmem:[%s508 + $0x178] sm:$0xff]
        %v1038 = vld [vmem:[%s508 + $0x180] sm:$0xff]
        %v1039 = vld [vmem:[%s508 + $0x188] sm:$0xff]
        %v1040 = vld [vmem:[%s508 + $0x190] sm:$0xff]
        %v1041 = vld [vmem:[%s508 + $0x198] sm:$0xff]
        %v1042 = vld [vmem:[%s508 + $0x1a0] sm:$0xff]
        %v1043 = vld [vmem:[%s508 + $0x1a8] sm:$0xff]
        %v1044 = vld [vmem:[%s508 + $0x1b0] sm:$0xff]
        %v1045 = vld [vmem:[%s508 + $0x1b8] sm:$0xff]
        %v1046 = vld [vmem:[%s508 + $0x1c0] sm:$0xff]
        %v1047 = vld [vmem:[%s508 + $0x1c8] sm:$0xff]
        %v1048 = vld [vmem:[%s508 + $0x1d0] sm:$0xff]
        %v1049 = vld [vmem:[%s508 + $0x1d8] sm:$0xff]
        %v1050 = vld [vmem:[%s508 + $0x1e0] sm:$0xff]
        %v1051 = vld [vmem:[%s508 + $0x1e8] sm:$0xff]
        %v1052 = vld [vmem:[%s508 + $0x1f0] sm:$0xff]
        %v1053 = vld [vmem:[%s508 + $0x1f8] sm:$0xff]
        %v1054 = vld [vmem:[%s514] sm:$0x3]
        %v1056 = vperm.slane %v1054, 0
        %v1057 = vperm.slane %v1054, 1
        %1060 = vmatpush.msra.mxu0 %v1020
        %1061 = vmatpush.msra.mxu0 %v1018
        %1062 = vmatpush.msra.mxu0 %v1016
        %1063 = vmatpush.msra.mxu0 %v1014
        %1064 = vmatpush.msra.mxu0 %v1012
        %1065 = vmatpush.msra.mxu0 %v1010
        %1066 = vmatpush.msra.mxu0 %v1008
        %1067 = vmatpush.msra.mxu0 %v1006
        %1068 = vmatpush.msra.mxu0 %v1004
        %1069 = vmatpush.msra.mxu0 %v1002
        %1070 = vmatpush.msra.mxu0 %v1000
        %1071 = vmatpush.msra.mxu0 %v998
        %1072 = vmatpush.msra.mxu0 %v996
        %1073 = vmatpush.msra.mxu0 %v994
        %1074 = vmatpush.msra.mxu0 %v992
        %1075 = vmatpush.msra.mxu0 %v990
        %1076 = vmatmul.f32.gmra.mxu0 %v926
        %v1077 = vpop.f32.mrf.mxu0
        %v1078 = vadd.f32 %v1056, %v1077
        %1079 = vmatmul.f32.gmra.mxu0 %v928
        %v1080 = vpop.f32.mrf.mxu0
        %v1081 = vadd.f32 %v1056, %v1080
        %1082 = vmatmul.f32.gmra.mxu0 %v930
        %v1083 = vpop.f32.mrf.mxu0
        %v1084 = vadd.f32 %v1056, %v1083
        %1085 = vmatmul.f32.gmra.mxu0 %v932
        %v1086 = vpop.f32.mrf.mxu0
        %v1087 = vadd.f32 %v1056, %v1086
        %1088 = vmatmul.f32.gmra.mxu0 %v934
        %v1089 = vpop.f32.mrf.mxu0
        %v1090 = vadd.f32 %v1056, %v1089
        %1091 = vmatmul.f32.gmra.mxu0 %v936
        %v1092 = vpop.f32.mrf.mxu0
        %v1093 = vadd.f32 %v1056, %v1092
        %1094 = vmatmul.f32.gmra.mxu0 %v938
        %v1095 = vpop.f32.mrf.mxu0
        %v1096 = vadd.f32 %v1056, %v1095
        %1097 = vmatmul.f32.gmra.mxu0 %v940
        %v1098 = vpop.f32.mrf.mxu0
        %v1099 = vadd.f32 %v1056, %v1098
        %1100 = vmatmul.f32.gmra.mxu0 %v942
        %v1101 = vpop.f32.mrf.mxu0
        %v1102 = vadd.f32 %v1056, %v1101
        %1103 = vmatmul.f32.gmra.mxu0 %v944
        %v1104 = vpop.f32.mrf.mxu0
        %v1105 = vadd.f32 %v1056, %v1104
        %1106 = vmatmul.f32.gmra.mxu0 %v946
        %v1107 = vpop.f32.mrf.mxu0
        %v1108 = vadd.f32 %v1056, %v1107
        %1109 = vmatmul.f32.gmra.mxu0 %v948
        %v1110 = vpop.f32.mrf.mxu0
        %v1111 = vadd.f32 %v1056, %v1110
        %1112 = vmatmul.f32.gmra.mxu0 %v950
        %v1113 = vpop.f32.mrf.mxu0
        %v1114 = vadd.f32 %v1056, %v1113
        %1115 = vmatmul.f32.gmra.mxu0 %v952
        %v1116 = vpop.f32.mrf.mxu0
        %v1117 = vadd.f32 %v1056, %v1116
        %1118 = vmatmul.f32.gmra.mxu0 %v954
        %v1119 = vpop.f32.mrf.mxu0
        %v1120 = vadd.f32 %v1056, %v1119
        %1121 = vmatmul.f32.gmra.mxu0 %v956
        %v1122 = vpop.f32.mrf.mxu0
        %v1123 = vadd.f32 %v1056, %v1122
        %1124 = vmatmul.f32.gmra.mxu0 %v958
        %v1125 = vpop.f32.mrf.mxu0
        %v1126 = vadd.f32 %v1056, %v1125
        %1127 = vmatmul.f32.gmra.mxu0 %v960
        %v1128 = vpop.f32.mrf.mxu0
        %v1129 = vadd.f32 %v1056, %v1128
        %1130 = vmatmul.f32.gmra.mxu0 %v962
        %v1131 = vpop.f32.mrf.mxu0
        %v1132 = vadd.f32 %v1056, %v1131
        %1133 = vmatmul.f32.gmra.mxu0 %v964
        %v1134 = vpop.f32.mrf.mxu0
        %v1135 = vadd.f32 %v1056, %v1134
        %1136 = vmatmul.f32.gmra.mxu0 %v966
        %v1137 = vpop.f32.mrf.mxu0
        %v1138 = vadd.f32 %v1056, %v1137
        %1139 = vmatmul.f32.gmra.mxu0 %v968
        %v1140 = vpop.f32.mrf.mxu0
        %v1141 = vadd.f32 %v1056, %v1140
        %1142 = vmatmul.f32.gmra.mxu0 %v970
        %v1143 = vpop.f32.mrf.mxu0
        %v1144 = vadd.f32 %v1056, %v1143
        %1145 = vmatmul.f32.gmra.mxu0 %v972
        %v1146 = vpop.f32.mrf.mxu0
        %v1147 = vadd.f32 %v1056, %v1146
        %1148 = vmatmul.f32.gmra.mxu0 %v974
        %v1149 = vpop.f32.mrf.mxu0
        %v1150 = vadd.f32 %v1056, %v1149
        %1151 = vmatmul.f32.gmra.mxu0 %v976
        %v1152 = vpop.f32.mrf.mxu0
        %v1153 = vadd.f32 %v1056, %v1152
        %1154 = vmatmul.f32.gmra.mxu0 %v978
        %v1155 = vpop.f32.mrf.mxu0
        %v1156 = vadd.f32 %v1056, %v1155
        %1157 = vmatmul.f32.gmra.mxu0 %v980
        %v1158 = vpop.f32.mrf.mxu0
        %v1159 = vadd.f32 %v1056, %v1158
        %1160 = vmatmul.f32.gmra.mxu0 %v982
        %v1161 = vpop.f32.mrf.mxu0
        %v1162 = vadd.f32 %v1056, %v1161
        %1163 = vmatmul.f32.gmra.mxu0 %v984
        %v1164 = vpop.f32.mrf.mxu0
        %v1165 = vadd.f32 %v1056, %v1164
        %1166 = vmatmul.f32.gmra.mxu0 %v986
        %v1167 = vpop.f32.mrf.mxu0
        %v1168 = vadd.f32 %v1056, %v1167
        %1169 = vmatmul.f32.gmra.mxu0 %v988
        %v1170 = vpop.f32.mrf.mxu0
        %v1171 = vadd.f32 %v1056, %v1170
        %1172 = vdwg.mxu0
        %1173 = vmatpush.msra.mxu0 %v1052
        %1174 = vmatpush.msra.mxu0 %v1050
        %1175 = vmatpush.msra.mxu0 %v1048
        %1176 = vmatpush.msra.mxu0 %v1046
        %1177 = vmatpush.msra.mxu0 %v1044
        %1178 = vmatpush.msra.mxu0 %v1042
        %1179 = vmatpush.msra.mxu0 %v1040
        %1180 = vmatpush.msra.mxu0 %v1038
        %1181 = vmatpush.msra.mxu0 %v1036
        %1182 = vmatpush.msra.mxu0 %v1034
        %1183 = vmatpush.msra.mxu0 %v1032
        %1184 = vmatpush.msra.mxu0 %v1030
        %1185 = vmatpush.msra.mxu0 %v1028
        %1186 = vmatpush.msra.mxu0 %v1026
        %1187 = vmatpush.msra.mxu0 %v1024
        %1188 = vmatpush.msra.mxu0 %v1022
        %1189 = vmatmul.f32.gmra.mxu0 %v927
        %v1190 = vpop.f32.mrf.mxu0
        %v1191 = vadd.f32 %v1078, %v1190
        %1192 = vmatmul.f32.gmra.mxu0 %v929
        %v1193 = vpop.f32.mrf.mxu0
        %v1194 = vadd.f32 %v1081, %v1193
        %1195 = vmatmul.f32.gmra.mxu0 %v931
        %v1196 = vpop.f32.mrf.mxu0
        %v1197 = vadd.f32 %v1084, %v1196
        %1198 = vmatmul.f32.gmra.mxu0 %v933
        %v1199 = vpop.f32.mrf.mxu0
        %v1200 = vadd.f32 %v1087, %v1199
        %1201 = vmatmul.f32.gmra.mxu0 %v935
        %v1202 = vpop.f32.mrf.mxu0
        %v1203 = vadd.f32 %v1090, %v1202
        %1204 = vmatmul.f32.gmra.mxu0 %v937
        %v1205 = vpop.f32.mrf.mxu0
        %v1206 = vadd.f32 %v1093, %v1205
        %1207 = vmatmul.f32.gmra.mxu0 %v939
        %v1208 = vpop.f32.mrf.mxu0
        %v1209 = vadd.f32 %v1096, %v1208
        %1210 = vmatmul.f32.gmra.mxu0 %v941
        %v1211 = vpop.f32.mrf.mxu0
        %v1212 = vadd.f32 %v1099, %v1211
        %1213 = vmatmul.f32.gmra.mxu0 %v943
        %v1214 = vpop.f32.mrf.mxu0
        %v1215 = vadd.f32 %v1102, %v1214
        %1216 = vmatmul.f32.gmra.mxu0 %v945
        %v1217 = vpop.f32.mrf.mxu0
        %v1218 = vadd.f32 %v1105, %v1217
        %1219 = vmatmul.f32.gmra.mxu0 %v947
        %v1220 = vpop.f32.mrf.mxu0
        %v1221 = vadd.f32 %v1108, %v1220
        %1222 = vmatmul.f32.gmra.mxu0 %v949
        %v1223 = vpop.f32.mrf.mxu0
        %v1224 = vadd.f32 %v1111, %v1223
        %1225 = vmatmul.f32.gmra.mxu0 %v951
        %v1226 = vpop.f32.mrf.mxu0
        %v1227 = vadd.f32 %v1114, %v1226
        %1228 = vmatmul.f32.gmra.mxu0 %v953
        %v1229 = vpop.f32.mrf.mxu0
        %v1230 = vadd.f32 %v1117, %v1229
        %1231 = vmatmul.f32.gmra.mxu0 %v955
        %v1232 = vpop.f32.mrf.mxu0
        %v1233 = vadd.f32 %v1120, %v1232
        %1234 = vmatmul.f32.gmra.mxu0 %v957
        %v1235 = vpop.f32.mrf.mxu0
        %v1236 = vadd.f32 %v1123, %v1235
        %1237 = vmatmul.f32.gmra.mxu0 %v959
        %v1238 = vpop.f32.mrf.mxu0
        %v1239 = vadd.f32 %v1126, %v1238
        %1240 = vmatmul.f32.gmra.mxu0 %v961
        %v1241 = vpop.f32.mrf.mxu0
        %v1242 = vadd.f32 %v1129, %v1241
        %1243 = vmatmul.f32.gmra.mxu0 %v963
        %v1244 = vpop.f32.mrf.mxu0
        %v1245 = vadd.f32 %v1132, %v1244
        %1246 = vmatmul.f32.gmra.mxu0 %v965
        %v1247 = vpop.f32.mrf.mxu0
        %v1248 = vadd.f32 %v1135, %v1247
        %1249 = vmatmul.f32.gmra.mxu0 %v967
        %v1250 = vpop.f32.mrf.mxu0
        %v1251 = vadd.f32 %v1138, %v1250
        %1252 = vmatmul.f32.gmra.mxu0 %v969
        %v1253 = vpop.f32.mrf.mxu0
        %v1254 = vadd.f32 %v1141, %v1253
        %1255 = vmatmul.f32.gmra.mxu0 %v971
        %v1256 = vpop.f32.mrf.mxu0
        %v1257 = vadd.f32 %v1144, %v1256
        %1258 = vmatmul.f32.gmra.mxu0 %v973
        %v1259 = vpop.f32.mrf.mxu0
        %v1260 = vadd.f32 %v1147, %v1259
        %1261 = vmatmul.f32.gmra.mxu0 %v975
        %v1262 = vpop.f32.mrf.mxu0
        %v1263 = vadd.f32 %v1150, %v1262
        %1264 = vmatmul.f32.gmra.mxu0 %v977
        %v1265 = vpop.f32.mrf.mxu0
        %v1266 = vadd.f32 %v1153, %v1265
        %1267 = vmatmul.f32.gmra.mxu0 %v979
        %v1268 = vpop.f32.mrf.mxu0
        %v1269 = vadd.f32 %v1156, %v1268
        %1270 = vmatmul.f32.gmra.mxu0 %v981
        %v1271 = vpop.f32.mrf.mxu0
        %v1272 = vadd.f32 %v1159, %v1271
        %1273 = vmatmul.f32.gmra.mxu0 %v983
        %v1274 = vpop.f32.mrf.mxu0
        %v1275 = vadd.f32 %v1162, %v1274
        %1276 = vmatmul.f32.gmra.mxu0 %v985
        %v1277 = vpop.f32.mrf.mxu0
        %v1278 = vadd.f32 %v1165, %v1277
        %1279 = vmatmul.f32.gmra.mxu0 %v987
        %v1280 = vpop.f32.mrf.mxu0
        %v1281 = vadd.f32 %v1168, %v1280
        %1282 = vmatmul.f32.gmra.mxu0 %v989
        %v1283 = vpop.f32.mrf.mxu0
        %v1284 = vadd.f32 %v1171, %v1283
        %1285 = vdwg.mxu0
        %1286 = vmatpush.msra.mxu0 %v1021
        %1287 = vmatpush.msra.mxu0 %v1019
        %1288 = vmatpush.msra.mxu0 %v1017
        %1289 = vmatpush.msra.mxu0 %v1015
        %1290 = vmatpush.msra.mxu0 %v1013
        %1291 = vmatpush.msra.mxu0 %v1011
        %1292 = vmatpush.msra.mxu0 %v1009
        %1293 = vmatpush.msra.mxu0 %v1007
        %1294 = vmatpush.msra.mxu0 %v1005
        %1295 = vmatpush.msra.mxu0 %v1003
        %1296 = vmatpush.msra.mxu0 %v1001
        %1297 = vmatpush.msra.mxu0 %v999
        %1298 = vmatpush.msra.mxu0 %v997
        %1299 = vmatpush.msra.mxu0 %v995
        %1300 = vmatpush.msra.mxu0 %v993
        %1301 = vmatpush.msra.mxu0 %v991
        %1302 = vmatmul.f32.gmra.mxu0 %v926
        %v1303 = vpop.f32.mrf.mxu0
        %v1304 = vadd.f32 %v1057, %v1303
        %1305 = vmatmul.f32.gmra.mxu0 %v928
        %v1306 = vpop.f32.mrf.mxu0
        %v1307 = vadd.f32 %v1057, %v1306
        %1308 = vmatmul.f32.gmra.mxu0 %v930
        %v1309 = vpop.f32.mrf.mxu0
        %v1310 = vadd.f32 %v1057, %v1309
        %1311 = vmatmul.f32.gmra.mxu0 %v932
        %v1312 = vpop.f32.mrf.mxu0
        %v1313 = vadd.f32 %v1057, %v1312
        %1314 = vmatmul.f32.gmra.mxu0 %v934
        %v1315 = vpop.f32.mrf.mxu0
        %v1316 = vadd.f32 %v1057, %v1315
        %1317 = vmatmul.f32.gmra.mxu0 %v936
        %v1318 = vpop.f32.mrf.mxu0
        %v1319 = vadd.f32 %v1057, %v1318
        %1320 = vmatmul.f32.gmra.mxu0 %v938
        %v1321 = vpop.f32.mrf.mxu0
        %v1322 = vadd.f32 %v1057, %v1321
        %1323 = vmatmul.f32.gmra.mxu0 %v940
        %v1324 = vpop.f32.mrf.mxu0
        %v1325 = vadd.f32 %v1057, %v1324
        %1326 = vmatmul.f32.gmra.mxu0 %v942
        %v1327 = vpop.f32.mrf.mxu0
        %v1328 = vadd.f32 %v1057, %v1327
        %1329 = vmatmul.f32.gmra.mxu0 %v944
        %v1330 = vpop.f32.mrf.mxu0
        %v1331 = vadd.f32 %v1057, %v1330
        %1332 = vmatmul.f32.gmra.mxu0 %v946
        %v1333 = vpop.f32.mrf.mxu0
        %v1334 = vadd.f32 %v1057, %v1333
        %1335 = vmatmul.f32.gmra.mxu0 %v948
        %v1336 = vpop.f32.mrf.mxu0
        %v1337 = vadd.f32 %v1057, %v1336
        %1338 = vmatmul.f32.gmra.mxu0 %v950
        %v1339 = vpop.f32.mrf.mxu0
        %v1340 = vadd.f32 %v1057, %v1339
        %1341 = vmatmul.f32.gmra.mxu0 %v952
        %v1342 = vpop.f32.mrf.mxu0
        %v1343 = vadd.f32 %v1057, %v1342
        %1344 = vmatmul.f32.gmra.mxu0 %v954
        %v1345 = vpop.f32.mrf.mxu0
        %v1346 = vadd.f32 %v1057, %v1345
        %1347 = vmatmul.f32.gmra.mxu0 %v956
        %v1348 = vpop.f32.mrf.mxu0
        %v1349 = vadd.f32 %v1057, %v1348
        %1350 = vmatmul.f32.gmra.mxu0 %v958
        %v1351 = vpop.f32.mrf.mxu0
        %v1352 = vadd.f32 %v1057, %v1351
        %1353 = vmatmul.f32.gmra.mxu0 %v960
        %v1354 = vpop.f32.mrf.mxu0
        %v1355 = vadd.f32 %v1057, %v1354
        %1356 = vmatmul.f32.gmra.mxu0 %v962
        %v1357 = vpop.f32.mrf.mxu0
        %v1358 = vadd.f32 %v1057, %v1357
        %1359 = vmatmul.f32.gmra.mxu0 %v964
        %v1360 = vpop.f32.mrf.mxu0
        %v1361 = vadd.f32 %v1057, %v1360
        %1362 = vmatmul.f32.gmra.mxu0 %v966
        %v1363 = vpop.f32.mrf.mxu0
        %v1364 = vadd.f32 %v1057, %v1363
        %1365 = vmatmul.f32.gmra.mxu0 %v968
        %v1366 = vpop.f32.mrf.mxu0
        %v1367 = vadd.f32 %v1057, %v1366
        %1368 = vmatmul.f32.gmra.mxu0 %v970
        %v1369 = vpop.f32.mrf.mxu0
        %v1370 = vadd.f32 %v1057, %v1369
        %1371 = vmatmul.f32.gmra.mxu0 %v972
        %v1372 = vpop.f32.mrf.mxu0
        %v1373 = vadd.f32 %v1057, %v1372
        %1374 = vmatmul.f32.gmra.mxu0 %v974
        %v1375 = vpop.f32.mrf.mxu0
        %v1376 = vadd.f32 %v1057, %v1375
        %1377 = vmatmul.f32.gmra.mxu0 %v976
        %v1378 = vpop.f32.mrf.mxu0
        %v1379 = vadd.f32 %v1057, %v1378
        %1380 = vmatmul.f32.gmra.mxu0 %v978
        %v1381 = vpop.f32.mrf.mxu0
        %v1382 = vadd.f32 %v1057, %v1381
        %1383 = vmatmul.f32.gmra.mxu0 %v980
        %v1384 = vpop.f32.mrf.mxu0
        %v1385 = vadd.f32 %v1057, %v1384
        %1386 = vmatmul.f32.gmra.mxu0 %v982
        %v1387 = vpop.f32.mrf.mxu0
        %v1388 = vadd.f32 %v1057, %v1387
        %1389 = vmatmul.f32.gmra.mxu0 %v984
        %v1390 = vpop.f32.mrf.mxu0
        %v1391 = vadd.f32 %v1057, %v1390
        %1392 = vmatmul.f32.gmra.mxu0 %v986
        %v1393 = vpop.f32.mrf.mxu0
        %v1394 = vadd.f32 %v1057, %v1393
        %1395 = vmatmul.f32.gmra.mxu0 %v988
        %v1396 = vpop.f32.mrf.mxu0
        %v1397 = vadd.f32 %v1057, %v1396
        %1398 = vdwg.mxu0
        %1399 = vmatpush.msra.mxu0 %v1053
        %1400 = vmatpush.msra.mxu0 %v1051
        %1401 = vmatpush.msra.mxu0 %v1049
        %1402 = vmatpush.msra.mxu0 %v1047
        %1403 = vmatpush.msra.mxu0 %v1045
        %1404 = vmatpush.msra.mxu0 %v1043
        %1405 = vmatpush.msra.mxu0 %v1041
        %1406 = vmatpush.msra.mxu0 %v1039
        %1407 = vmatpush.msra.mxu0 %v1037
        %1408 = vmatpush.msra.mxu0 %v1035
        %1409 = vmatpush.msra.mxu0 %v1033
        %1410 = vmatpush.msra.mxu0 %v1031
        %1411 = vmatpush.msra.mxu0 %v1029
        %1412 = vmatpush.msra.mxu0 %v1027
        %1413 = vmatpush.msra.mxu0 %v1025
        %1414 = vmatpush.msra.mxu0 %v1023
        %1415 = vmatmul.f32.gmra.mxu0 %v927
        %v1416 = vpop.f32.mrf.mxu0
        %v1417 = vadd.f32 %v1304, %v1416
        %1418 = vmatmul.f32.gmra.mxu0 %v929
        %v1419 = vpop.f32.mrf.mxu0
        %v1420 = vadd.f32 %v1307, %v1419
        %1421 = vmatmul.f32.gmra.mxu0 %v931
        %v1422 = vpop.f32.mrf.mxu0
        %v1423 = vadd.f32 %v1310, %v1422
        %1424 = vmatmul.f32.gmra.mxu0 %v933
        %v1425 = vpop.f32.mrf.mxu0
        %v1426 = vadd.f32 %v1313, %v1425
        %1427 = vmatmul.f32.gmra.mxu0 %v935
        %v1428 = vpop.f32.mrf.mxu0
        %v1429 = vadd.f32 %v1316, %v1428
        %1430 = vmatmul.f32.gmra.mxu0 %v937
        %v1431 = vpop.f32.mrf.mxu0
        %v1432 = vadd.f32 %v1319, %v1431
        %1433 = vmatmul.f32.gmra.mxu0 %v939
        %v1434 = vpop.f32.mrf.mxu0
        %v1435 = vadd.f32 %v1322, %v1434
        %1436 = vmatmul.f32.gmra.mxu0 %v941
        %v1437 = vpop.f32.mrf.mxu0
        %v1438 = vadd.f32 %v1325, %v1437
        %1439 = vmatmul.f32.gmra.mxu0 %v943
        %v1440 = vpop.f32.mrf.mxu0
        %v1441 = vadd.f32 %v1328, %v1440
        %1442 = vmatmul.f32.gmra.mxu0 %v945
        %v1443 = vpop.f32.mrf.mxu0
        %v1444 = vadd.f32 %v1331, %v1443
        %1445 = vmatmul.f32.gmra.mxu0 %v947
        %v1446 = vpop.f32.mrf.mxu0
        %v1447 = vadd.f32 %v1334, %v1446
        %1448 = vmatmul.f32.gmra.mxu0 %v949
        %v1449 = vpop.f32.mrf.mxu0
        %v1450 = vadd.f32 %v1337, %v1449
        %1451 = vmatmul.f32.gmra.mxu0 %v951
        %v1452 = vpop.f32.mrf.mxu0
        %v1453 = vadd.f32 %v1340, %v1452
        %1454 = vmatmul.f32.gmra.mxu0 %v953
        %v1455 = vpop.f32.mrf.mxu0
        %v1456 = vadd.f32 %v1343, %v1455
        %1457 = vmatmul.f32.gmra.mxu0 %v955
        %v1458 = vpop.f32.mrf.mxu0
        %v1459 = vadd.f32 %v1346, %v1458
        %1460 = vmatmul.f32.gmra.mxu0 %v957
        %v1461 = vpop.f32.mrf.mxu0
        %v1462 = vadd.f32 %v1349, %v1461
        %1463 = vmatmul.f32.gmra.mxu0 %v959
        %v1464 = vpop.f32.mrf.mxu0
        %v1465 = vadd.f32 %v1352, %v1464
        %1466 = vmatmul.f32.gmra.mxu0 %v961
        %v1467 = vpop.f32.mrf.mxu0
        %v1468 = vadd.f32 %v1355, %v1467
        %1469 = vmatmul.f32.gmra.mxu0 %v963
        %v1470 = vpop.f32.mrf.mxu0
        %v1471 = vadd.f32 %v1358, %v1470
        %1472 = vmatmul.f32.gmra.mxu0 %v965
        %v1473 = vpop.f32.mrf.mxu0
        %v1474 = vadd.f32 %v1361, %v1473
        %1475 = vmatmul.f32.gmra.mxu0 %v967
        %v1476 = vpop.f32.mrf.mxu0
        %v1477 = vadd.f32 %v1364, %v1476
        %1478 = vmatmul.f32.gmra.mxu0 %v969
        %v1479 = vpop.f32.mrf.mxu0
        %v1480 = vadd.f32 %v1367, %v1479
        %1481 = vmatmul.f32.gmra.mxu0 %v971
        %v1482 = vpop.f32.mrf.mxu0
        %v1483 = vadd.f32 %v1370, %v1482
        %1484 = vmatmul.f32.gmra.mxu0 %v973
        %v1485 = vpop.f32.mrf.mxu0
        %v1486 = vadd.f32 %v1373, %v1485
        %1487 = vmatmul.f32.gmra.mxu0 %v975
        %v1488 = vpop.f32.mrf.mxu0
        %v1489 = vadd.f32 %v1376, %v1488
        %1490 = vmatmul.f32.gmra.mxu0 %v977
        %v1491 = vpop.f32.mrf.mxu0
        %v1492 = vadd.f32 %v1379, %v1491
        %1493 = vmatmul.f32.gmra.mxu0 %v979
        %v1494 = vpop.f32.mrf.mxu0
        %v1495 = vadd.f32 %v1382, %v1494
        %1496 = vmatmul.f32.gmra.mxu0 %v981
        %v1497 = vpop.f32.mrf.mxu0
        %v1498 = vadd.f32 %v1385, %v1497
        %1499 = vmatmul.f32.gmra.mxu0 %v983
        %v1500 = vpop.f32.mrf.mxu0
        %v1501 = vadd.f32 %v1388, %v1500
        %1502 = vmatmul.f32.gmra.mxu0 %v985
        %v1503 = vpop.f32.mrf.mxu0
        %v1504 = vadd.f32 %v1391, %v1503
        %1505 = vmatmul.f32.gmra.mxu0 %v987
        %v1506 = vpop.f32.mrf.mxu0
        %v1507 = vadd.f32 %v1394, %v1506
        %1508 = vmatmul.f32.gmra.mxu0 %v989
        %v1509 = vpop.f32.mrf.mxu0
        %v1510 = vadd.f32 %v1397, %v1509
        %1511 = vdwg.mxu0
        %v1512 = vtanh.pop %v1191
        %v1513 = vtanh.pop %v1417
        %v1514 = vtanh.pop %v1194
        %v1515 = vtanh.pop %v1420
        %v1516 = vtanh.pop %v1197
        %v1517 = vtanh.pop %v1423
        %v1518 = vtanh.pop %v1200
        %v1519 = vtanh.pop %v1426
        %v1520 = vtanh.pop %v1203
        %v1521 = vtanh.pop %v1429
        %v1522 = vtanh.pop %v1206
        %v1523 = vtanh.pop %v1432
        %v1524 = vtanh.pop %v1209
        %v1525 = vtanh.pop %v1435
        %v1526 = vtanh.pop %v1212
        %v1527 = vtanh.pop %v1438
        %v1528 = vtanh.pop %v1215
        %v1529 = vtanh.pop %v1441
        %v1530 = vtanh.pop %v1218
        %v1531 = vtanh.pop %v1444
        %v1532 = vtanh.pop %v1221
        %v1533 = vtanh.pop %v1447
        %v1534 = vtanh.pop %v1224
        %v1535 = vtanh.pop %v1450
        %v1536 = vtanh.pop %v1227
        %v1537 = vtanh.pop %v1453
        %v1538 = vtanh.pop %v1230
        %v1539 = vtanh.pop %v1456
        %v1540 = vtanh.pop %v1233
        %v1541 = vtanh.pop %v1459
        %v1542 = vtanh.pop %v1236
        %v1543 = vtanh.pop %v1462
        %v1544 = vtanh.pop %v1239
        %v1545 = vtanh.pop %v1465
        %v1546 = vtanh.pop %v1242
        %v1547 = vtanh.pop %v1468
        %v1548 = vtanh.pop %v1245
        %v1549 = vtanh.pop %v1471
        %v1550 = vtanh.pop %v1248
        %v1551 = vtanh.pop %v1474
        %v1552 = vtanh.pop %v1251
        %v1553 = vtanh.pop %v1477
        %v1554 = vtanh.pop %v1254
        %v1555 = vtanh.pop %v1480
        %v1556 = vtanh.pop %v1257
        %v1557 = vtanh.pop %v1483
        %v1558 = vtanh.pop %v1260
        %v1559 = vtanh.pop %v1486
        %v1560 = vtanh.pop %v1263
        %v1561 = vtanh.pop %v1489
        %v1562 = vtanh.pop %v1266
        %v1563 = vtanh.pop %v1492
        %v1564 = vtanh.pop %v1269
        %v1565 = vtanh.pop %v1495
        %v1566 = vtanh.pop %v1272
        %v1567 = vtanh.pop %v1498
        %v1568 = vtanh.pop %v1275
        %v1569 = vtanh.pop %v1501
        %v1570 = vtanh.pop %v1278
        %v1571 = vtanh.pop %v1504
        %v1572 = vtanh.pop %v1281
        %v1573 = vtanh.pop %v1507
        %v1574 = vtanh.pop %v1284
        %v1575 = vtanh.pop %v1510
        %v1576 = vadd.f32 %v1512, %v926
        %v1577 = vadd.f32 %v1513, %v927
        %v1578 = vadd.f32 %v1514, %v928
        %v1579 = vadd.f32 %v1515, %v929
        %v1580 = vadd.f32 %v1516, %v930
        %v1581 = vadd.f32 %v1517, %v931
        %v1582 = vadd.f32 %v1518, %v932
        %v1583 = vadd.f32 %v1519, %v933
        %v1584 = vadd.f32 %v1520, %v934
        %v1585 = vadd.f32 %v1521, %v935
        %v1586 = vadd.f32 %v1522, %v936
        %v1587 = vadd.f32 %v1523, %v937
        %v1588 = vadd.f32 %v1524, %v938
        %v1589 = vadd.f32 %v1525, %v939
        %v1590 = vadd.f32 %v1526, %v940
        %v1591 = vadd.f32 %v1527, %v941
        %v1592 = vadd.f32 %v1528, %v942
        %v1593 = vadd.f32 %v1529, %v943
        %v1594 = vadd.f32 %v1530, %v944
        %v1595 = vadd.f32 %v1531, %v945
        %v1596 = vadd.f32 %v1532, %v946
        %v1597 = vadd.f32 %v1533, %v947
        %v1598 = vadd.f32 %v1534, %v948
        %v1599 = vadd.f32 %v1535, %v949
        %v1600 = vadd.f32 %v1536, %v950
        %v1601 = vadd.f32 %v1537, %v951
        %v1602 = vadd.f32 %v1538, %v952
        %v1603 = vadd.f32 %v1539, %v953
        %v1604 = vadd.f32 %v1540, %v954
        %v1605 = vadd.f32 %v1541, %v955
        %v1606 = vadd.f32 %v1542, %v956
        %v1607 = vadd.f32 %v1543, %v957
        %v1608 = vadd.f32 %v1544, %v958
        %v1609 = vadd.f32 %v1545, %v959
        %v1610 = vadd.f32 %v1546, %v960
        %v1611 = vadd.f32 %v1547, %v961
        %v1612 = vadd.f32 %v1548, %v962
        %v1613 = vadd.f32 %v1549, %v963
        %v1614 = vadd.f32 %v1550, %v964
        %v1615 = vadd.f32 %v1551, %v965
        %v1616 = vadd.f32 %v1552, %v966
        %v1617 = vadd.f32 %v1553, %v967
        %v1618 = vadd.f32 %v1554, %v968
        %v1619 = vadd.f32 %v1555, %v969
        %v1620 = vadd.f32 %v1556, %v970
        %v1621 = vadd.f32 %v1557, %v971
        %v1622 = vadd.f32 %v1558, %v972
        %v1623 = vadd.f32 %v1559, %v973
        %v1624 = vadd.f32 %v1560, %v974
        %v1625 = vadd.f32 %v1561, %v975
        %v1626 = vadd.f32 %v1562, %v976
        %v1627 = vadd.f32 %v1563, %v977
        %v1628 = vadd.f32 %v1564, %v978
        %v1629 = vadd.f32 %v1565, %v979
        %v1630 = vadd.f32 %v1566, %v980
        %v1631 = vadd.f32 %v1567, %v981
        %v1632 = vadd.f32 %v1568, %v982
        %v1633 = vadd.f32 %v1569, %v983
        %v1634 = vadd.f32 %v1570, %v984
        %v1635 = vadd.f32 %v1571, %v985
        %v1636 = vadd.f32 %v1572, %v986
        %v1637 = vadd.f32 %v1573, %v987
        %v1638 = vadd.f32 %v1574, %v988
        %v1639 = vadd.f32 %v1575, %v989
        %v1640 = vld [vmem:[%s521] sm:$0xff]
        %v1641 = vld [vmem:[%s521 + $0x8] sm:$0xff]
        %v1642 = vld [vmem:[%s521 + $0x10] sm:$0xff]
        %v1643 = vld [vmem:[%s521 + $0x18] sm:$0xff]
        %v1644 = vld [vmem:[%s521 + $0x20] sm:$0xff]
        %v1645 = vld [vmem:[%s521 + $0x28] sm:$0xff]
        %v1646 = vld [vmem:[%s521 + $0x30] sm:$0xff]
        %v1647 = vld [vmem:[%s521 + $0x38] sm:$0xff]
        %v1648 = vld [vmem:[%s521 + $0x40] sm:$0xff]
        %v1649 = vld [vmem:[%s521 + $0x48] sm:$0xff]
        %v1650 = vld [vmem:[%s521 + $0x50] sm:$0xff]
        %v1651 = vld [vmem:[%s521 + $0x58] sm:$0xff]
        %v1652 = vld [vmem:[%s521 + $0x60] sm:$0xff]
        %v1653 = vld [vmem:[%s521 + $0x68] sm:$0xff]
        %v1654 = vld [vmem:[%s521 + $0x70] sm:$0xff]
        %v1655 = vld [vmem:[%s521 + $0x78] sm:$0xff]
        %v1656 = vld [vmem:[%s521 + $0x80] sm:$0xff]
        %v1657 = vld [vmem:[%s521 + $0x88] sm:$0xff]
        %v1658 = vld [vmem:[%s521 + $0x90] sm:$0xff]
        %v1659 = vld [vmem:[%s521 + $0x98] sm:$0xff]
        %v1660 = vld [vmem:[%s521 + $0xa0] sm:$0xff]
        %v1661 = vld [vmem:[%s521 + $0xa8] sm:$0xff]
        %v1662 = vld [vmem:[%s521 + $0xb0] sm:$0xff]
        %v1663 = vld [vmem:[%s521 + $0xb8] sm:$0xff]
        %v1664 = vld [vmem:[%s521 + $0xc0] sm:$0xff]
        %v1665 = vld [vmem:[%s521 + $0xc8] sm:$0xff]
        %v1666 = vld [vmem:[%s521 + $0xd0] sm:$0xff]
        %v1667 = vld [vmem:[%s521 + $0xd8] sm:$0xff]
        %v1668 = vld [vmem:[%s521 + $0xe0] sm:$0xff]
        %v1669 = vld [vmem:[%s521 + $0xe8] sm:$0xff]
        %v1670 = vld [vmem:[%s521 + $0xf0] sm:$0xff]
        %v1671 = vld [vmem:[%s521 + $0xf8] sm:$0xff]
        %v1672 = vld [vmem:[%s521 + $0x100] sm:$0xff]
        %v1673 = vld [vmem:[%s521 + $0x108] sm:$0xff]
        %v1674 = vld [vmem:[%s521 + $0x110] sm:$0xff]
        %v1675 = vld [vmem:[%s521 + $0x118] sm:$0xff]
        %v1676 = vld [vmem:[%s521 + $0x120] sm:$0xff]
        %v1677 = vld [vmem:[%s521 + $0x128] sm:$0xff]
        %v1678 = vld [vmem:[%s521 + $0x130] sm:$0xff]
        %v1679 = vld [vmem:[%s521 + $0x138] sm:$0xff]
        %v1680 = vld [vmem:[%s521 + $0x140] sm:$0xff]
        %v1681 = vld [vmem:[%s521 + $0x148] sm:$0xff]
        %v1682 = vld [vmem:[%s521 + $0x150] sm:$0xff]
        %v1683 = vld [vmem:[%s521 + $0x158] sm:$0xff]
        %v1684 = vld [vmem:[%s521 + $0x160] sm:$0xff]
        %v1685 = vld [vmem:[%s521 + $0x168] sm:$0xff]
        %v1686 = vld [vmem:[%s521 + $0x170] sm:$0xff]
        %v1687 = vld [vmem:[%s521 + $0x178] sm:$0xff]
        %v1688 = vld [vmem:[%s521 + $0x180] sm:$0xff]
        %v1689 = vld [vmem:[%s521 + $0x188] sm:$0xff]
        %v1690 = vld [vmem:[%s521 + $0x190] sm:$0xff]
        %v1691 = vld [vmem:[%s521 + $0x198] sm:$0xff]
        %v1692 = vld [vmem:[%s521 + $0x1a0] sm:$0xff]
        %v1693 = vld [vmem:[%s521 + $0x1a8] sm:$0xff]
        %v1694 = vld [vmem:[%s521 + $0x1b0] sm:$0xff]
        %v1695 = vld [vmem:[%s521 + $0x1b8] sm:$0xff]
        %v1696 = vld [vmem:[%s521 + $0x1c0] sm:$0xff]
        %v1697 = vld [vmem:[%s521 + $0x1c8] sm:$0xff]
        %v1698 = vld [vmem:[%s521 + $0x1d0] sm:$0xff]
        %v1699 = vld [vmem:[%s521 + $0x1d8] sm:$0xff]
        %v1700 = vld [vmem:[%s521 + $0x1e0] sm:$0xff]
        %v1701 = vld [vmem:[%s521 + $0x1e8] sm:$0xff]
        %v1702 = vld [vmem:[%s521 + $0x1f0] sm:$0xff]
        %v1703 = vld [vmem:[%s521 + $0x1f8] sm:$0xff]
        %v1704 = vld [vmem:[%s527] sm:$0x3]
        %v1706 = vperm.slane %v1704, 0
        %v1707 = vperm.slane %v1704, 1
        %1710 = vmatpush.msra.mxu0 %v1670
        %1711 = vmatpush.msra.mxu0 %v1668
        %1712 = vmatpush.msra.mxu0 %v1666
        %1713 = vmatpush.msra.mxu0 %v1664
        %1714 = vmatpush.msra.mxu0 %v1662
        %1715 = vmatpush.msra.mxu0 %v1660
        %1716 = vmatpush.msra.mxu0 %v1658
        %1717 = vmatpush.msra.mxu0 %v1656
        %1718 = vmatpush.msra.mxu0 %v1654
        %1719 = vmatpush.msra.mxu0 %v1652
        %1720 = vmatpush.msra.mxu0 %v1650
        %1721 = vmatpush.msra.mxu0 %v1648
        %1722 = vmatpush.msra.mxu0 %v1646
        %1723 = vmatpush.msra.mxu0 %v1644
        %1724 = vmatpush.msra.mxu0 %v1642
        %1725 = vmatpush.msra.mxu0 %v1640
        %1726 = vmatmul.f32.gmra.mxu0 %v1576
        %v1727 = vpop.f32.mrf.mxu0
        %v1728 = vadd.f32 %v1706, %v1727
        %1729 = vmatmul.f32.gmra.mxu0 %v1578
        %v1730 = vpop.f32.mrf.mxu0
        %v1731 = vadd.f32 %v1706, %v1730
        %1732 = vmatmul.f32.gmra.mxu0 %v1580
        %v1733 = vpop.f32.mrf.mxu0
        %v1734 = vadd.f32 %v1706, %v1733
        %1735 = vmatmul.f32.gmra.mxu0 %v1582
        %v1736 = vpop.f32.mrf.mxu0
        %v1737 = vadd.f32 %v1706, %v1736
        %1738 = vmatmul.f32.gmra.mxu0 %v1584
        %v1739 = vpop.f32.mrf.mxu0
        %v1740 = vadd.f32 %v1706, %v1739
        %1741 = vmatmul.f32.gmra.mxu0 %v1586
        %v1742 = vpop.f32.mrf.mxu0
        %v1743 = vadd.f32 %v1706, %v1742
        %1744 = vmatmul.f32.gmra.mxu0 %v1588
        %v1745 = vpop.f32.mrf.mxu0
        %v1746 = vadd.f32 %v1706, %v1745
        %1747 = vmatmul.f32.gmra.mxu0 %v1590
        %v1748 = vpop.f32.mrf.mxu0
        %v1749 = vadd.f32 %v1706, %v1748
        %1750 = vmatmul.f32.gmra.mxu0 %v1592
        %v1751 = vpop.f32.mrf.mxu0
        %v1752 = vadd.f32 %v1706, %v1751
        %1753 = vmatmul.f32.gmra.mxu0 %v1594
        %v1754 = vpop.f32.mrf.mxu0
        %v1755 = vadd.f32 %v1706, %v1754
        %1756 = vmatmul.f32.gmra.mxu0 %v1596
        %v1757 = vpop.f32.mrf.mxu0
        %v1758 = vadd.f32 %v1706, %v1757
        %1759 = vmatmul.f32.gmra.mxu0 %v1598
        %v1760 = vpop.f32.mrf.mxu0
        %v1761 = vadd.f32 %v1706, %v1760
        %1762 = vmatmul.f32.gmra.mxu0 %v1600
        %v1763 = vpop.f32.mrf.mxu0
        %v1764 = vadd.f32 %v1706, %v1763
        %1765 = vmatmul.f32.gmra.mxu0 %v1602
        %v1766 = vpop.f32.mrf.mxu0
        %v1767 = vadd.f32 %v1706, %v1766
        %1768 = vmatmul.f32.gmra.mxu0 %v1604
        %v1769 = vpop.f32.mrf.mxu0
        %v1770 = vadd.f32 %v1706, %v1769
        %1771 = vmatmul.f32.gmra.mxu0 %v1606
        %v1772 = vpop.f32.mrf.mxu0
        %v1773 = vadd.f32 %v1706, %v1772
        %1774 = vmatmul.f32.gmra.mxu0 %v1608
        %v1775 = vpop.f32.mrf.mxu0
        %v1776 = vadd.f32 %v1706, %v1775
        %1777 = vmatmul.f32.gmra.mxu0 %v1610
        %v1778 = vpop.f32.mrf.mxu0
        %v1779 = vadd.f32 %v1706, %v1778
        %1780 = vmatmul.f32.gmra.mxu0 %v1612
        %v1781 = vpop.f32.mrf.mxu0
        %v1782 = vadd.f32 %v1706, %v1781
        %1783 = vmatmul.f32.gmra.mxu0 %v1614
        %v1784 = vpop.f32.mrf.mxu0
        %v1785 = vadd.f32 %v1706, %v1784
        %1786 = vmatmul.f32.gmra.mxu0 %v1616
        %v1787 = vpop.f32.mrf.mxu0
        %v1788 = vadd.f32 %v1706, %v1787
        %1789 = vmatmul.f32.gmra.mxu0 %v1618
        %v1790 = vpop.f32.mrf.mxu0
        %v1791 = vadd.f32 %v1706, %v1790
        %1792 = vmatmul.f32.gmra.mxu0 %v1620
        %v1793 = vpop.f32.mrf.mxu0
        %v1794 = vadd.f32 %v1706, %v1793
        %1795 = vmatmul.f32.gmra.mxu0 %v1622
        %v1796 = vpop.f32.mrf.mxu0
        %v1797 = vadd.f32 %v1706, %v1796
        %1798 = vmatmul.f32.gmra.mxu0 %v1624
        %v1799 = vpop.f32.mrf.mxu0
        %v1800 = vadd.f32 %v1706, %v1799
        %1801 = vmatmul.f32.gmra.mxu0 %v1626
        %v1802 = vpop.f32.mrf.mxu0
        %v1803 = vadd.f32 %v1706, %v1802
        %1804 = vmatmul.f32.gmra.mxu0 %v1628
        %v1805 = vpop.f32.mrf.mxu0
        %v1806 = vadd.f32 %v1706, %v1805
        %1807 = vmatmul.f32.gmra.mxu0 %v1630
        %v1808 = vpop.f32.mrf.mxu0
        %v1809 = vadd.f32 %v1706, %v1808
        %1810 = vmatmul.f32.gmra.mxu0 %v1632
        %v1811 = vpop.f32.mrf.mxu0
        %v1812 = vadd.f32 %v1706, %v1811
        %1813 = vmatmul.f32.gmra.mxu0 %v1634
        %v1814 = vpop.f32.mrf.mxu0
        %v1815 = vadd.f32 %v1706, %v1814
        %1816 = vmatmul.f32.gmra.mxu0 %v1636
        %v1817 = vpop.f32.mrf.mxu0
        %v1818 = vadd.f32 %v1706, %v1817
        %1819 = vmatmul.f32.gmra.mxu0 %v1638
        %v1820 = vpop.f32.mrf.mxu0
        %v1821 = vadd.f32 %v1706, %v1820
        %1822 = vdwg.mxu0
        %1823 = vmatpush.msra.mxu0 %v1702
        %1824 = vmatpush.msra.mxu0 %v1700
        %1825 = vmatpush.msra.mxu0 %v1698
        %1826 = vmatpush.msra.mxu0 %v1696
        %1827 = vmatpush.msra.mxu0 %v1694
        %1828 = vmatpush.msra.mxu0 %v1692
        %1829 = vmatpush.msra.mxu0 %v1690
        %1830 = vmatpush.msra.mxu0 %v1688
        %1831 = vmatpush.msra.mxu0 %v1686
        %1832 = vmatpush.msra.mxu0 %v1684
        %1833 = vmatpush.msra.mxu0 %v1682
        %1834 = vmatpush.msra.mxu0 %v1680
        %1835 = vmatpush.msra.mxu0 %v1678
        %1836 = vmatpush.msra.mxu0 %v1676
        %1837 = vmatpush.msra.mxu0 %v1674
        %1838 = vmatpush.msra.mxu0 %v1672
        %1839 = vmatmul.f32.gmra.mxu0 %v1577
        %v1840 = vpop.f32.mrf.mxu0
        %v1841 = vadd.f32 %v1728, %v1840
        %1842 = vmatmul.f32.gmra.mxu0 %v1579
        %v1843 = vpop.f32.mrf.mxu0
        %v1844 = vadd.f32 %v1731, %v1843
        %1845 = vmatmul.f32.gmra.mxu0 %v1581
        %v1846 = vpop.f32.mrf.mxu0
        %v1847 = vadd.f32 %v1734, %v1846
        %1848 = vmatmul.f32.gmra.mxu0 %v1583
        %v1849 = vpop.f32.mrf.mxu0
        %v1850 = vadd.f32 %v1737, %v1849
        %1851 = vmatmul.f32.gmra.mxu0 %v1585
        %v1852 = vpop.f32.mrf.mxu0
        %v1853 = vadd.f32 %v1740, %v1852
        %1854 = vmatmul.f32.gmra.mxu0 %v1587
        %v1855 = vpop.f32.mrf.mxu0
        %v1856 = vadd.f32 %v1743, %v1855
        %1857 = vmatmul.f32.gmra.mxu0 %v1589
        %v1858 = vpop.f32.mrf.mxu0
        %v1859 = vadd.f32 %v1746, %v1858
        %1860 = vmatmul.f32.gmra.mxu0 %v1591
        %v1861 = vpop.f32.mrf.mxu0
        %v1862 = vadd.f32 %v1749, %v1861
        %1863 = vmatmul.f32.gmra.mxu0 %v1593
        %v1864 = vpop.f32.mrf.mxu0
        %v1865 = vadd.f32 %v1752, %v1864
        %1866 = vmatmul.f32.gmra.mxu0 %v1595
        %v1867 = vpop.f32.mrf.mxu0
        %v1868 = vadd.f32 %v1755, %v1867
        %1869 = vmatmul.f32.gmra.mxu0 %v1597
        %v1870 = vpop.f32.mrf.mxu0
        %v1871 = vadd.f32 %v1758, %v1870
        %1872 = vmatmul.f32.gmra.mxu0 %v1599
        %v1873 = vpop.f32.mrf.mxu0
        %v1874 = vadd.f32 %v1761, %v1873
        %1875 = vmatmul.f32.gmra.mxu0 %v1601
        %v1876 = vpop.f32.mrf.mxu0
        %v1877 = vadd.f32 %v1764, %v1876
        %1878 = vmatmul.f32.gmra.mxu0 %v1603
        %v1879 = vpop.f32.mrf.mxu0
        %v1880 = vadd.f32 %v1767, %v1879
        %1881 = vmatmul.f32.gmra.mxu0 %v1605
        %v1882 = vpop.f32.mrf.mxu0
        %v1883 = vadd.f32 %v1770, %v1882
        %1884 = vmatmul.f32.gmra.mxu0 %v1607
        %v1885 = vpop.f32.mrf.mxu0
        %v1886 = vadd.f32 %v1773, %v1885
        %1887 = vmatmul.f32.gmra.mxu0 %v1609
        %v1888 = vpop.f32.mrf.mxu0
        %v1889 = vadd.f32 %v1776, %v1888
        %1890 = vmatmul.f32.gmra.mxu0 %v1611
        %v1891 = vpop.f32.mrf.mxu0
        %v1892 = vadd.f32 %v1779, %v1891
        %1893 = vmatmul.f32.gmra.mxu0 %v1613
        %v1894 = vpop.f32.mrf.mxu0
        %v1895 = vadd.f32 %v1782, %v1894
        %1896 = vmatmul.f32.gmra.mxu0 %v1615
        %v1897 = vpop.f32.mrf.mxu0
        %v1898 = vadd.f32 %v1785, %v1897
        %1899 = vmatmul.f32.gmra.mxu0 %v1617
        %v1900 = vpop.f32.mrf.mxu0
        %v1901 = vadd.f32 %v1788, %v1900
        %1902 = vmatmul.f32.gmra.mxu0 %v1619
        %v1903 = vpop.f32.mrf.mxu0
        %v1904 = vadd.f32 %v1791, %v1903
        %1905 = vmatmul.f32.gmra.mxu0 %v1621
        %v1906 = vpop.f32.mrf.mxu0
        %v1907 = vadd.f32 %v1794, %v1906
        %1908 = vmatmul.f32.gmra.mxu0 %v1623
        %v1909 = vpop.f32.mrf.mxu0
        %v1910 = vadd.f32 %v1797, %v1909
        %1911 = vmatmul.f32.gmra.mxu0 %v1625
        %v1912 = vpop.f32.mrf.mxu0
        %v1913 = vadd.f32 %v1800, %v1912
        %1914 = vmatmul.f32.gmra.mxu0 %v1627
        %v1915 = vpop.f32.mrf.mxu0
        %v1916 = vadd.f32 %v1803, %v1915
        %1917 = vmatmul.f32.gmra.mxu0 %v1629
        %v1918 = vpop.f32.mrf.mxu0
        %v1919 = vadd.f32 %v1806, %v1918
        %1920 = vmatmul.f32.gmra.mxu0 %v1631
        %v1921 = vpop.f32.mrf.mxu0
        %v1922 = vadd.f32 %v1809, %v1921
        %1923 = vmatmul.f32.gmra.mxu0 %v1633
        %v1924 = vpop.f32.mrf.mxu0
        %v1925 = vadd.f32 %v1812, %v1924
        %1926 = vmatmul.f32.gmra.mxu0 %v1635
        %v1927 = vpop.f32.mrf.mxu0
        %v1928 = vadd.f32 %v1815, %v1927
        %1929 = vmatmul.f32.gmra.mxu0 %v1637
        %v1930 = vpop.f32.mrf.mxu0
        %v1931 = vadd.f32 %v1818, %v1930
        %1932 = vmatmul.f32.gmra.mxu0 %v1639
        %v1933 = vpop.f32.mrf.mxu0
        %v1934 = vadd.f32 %v1821, %v1933
        %1935 = vdwg.mxu0
        %1936 = vmatpush.msra.mxu0 %v1671
        %1937 = vmatpush.msra.mxu0 %v1669
        %1938 = vmatpush.msra.mxu0 %v1667
        %1939 = vmatpush.msra.mxu0 %v1665
        %1940 = vmatpush.msra.mxu0 %v1663
        %1941 = vmatpush.msra.mxu0 %v1661
        %1942 = vmatpush.msra.mxu0 %v1659
        %1943 = vmatpush.msra.mxu0 %v1657
        %1944 = vmatpush.msra.mxu0 %v1655
        %1945 = vmatpush.msra.mxu0 %v1653
        %1946 = vmatpush.msra.mxu0 %v1651
        %1947 = vmatpush.msra.mxu0 %v1649
        %1948 = vmatpush.msra.mxu0 %v1647
        %1949 = vmatpush.msra.mxu0 %v1645
        %1950 = vmatpush.msra.mxu0 %v1643
        %1951 = vmatpush.msra.mxu0 %v1641
        %1952 = vmatmul.f32.gmra.mxu0 %v1576
        %v1953 = vpop.f32.mrf.mxu0
        %v1954 = vadd.f32 %v1707, %v1953
        %1955 = vmatmul.f32.gmra.mxu0 %v1578
        %v1956 = vpop.f32.mrf.mxu0
        %v1957 = vadd.f32 %v1707, %v1956
        %1958 = vmatmul.f32.gmra.mxu0 %v1580
        %v1959 = vpop.f32.mrf.mxu0
        %v1960 = vadd.f32 %v1707, %v1959
        %1961 = vmatmul.f32.gmra.mxu0 %v1582
        %v1962 = vpop.f32.mrf.mxu0
        %v1963 = vadd.f32 %v1707, %v1962
        %1964 = vmatmul.f32.gmra.mxu0 %v1584
        %v1965 = vpop.f32.mrf.mxu0
        %v1966 = vadd.f32 %v1707, %v1965
        %1967 = vmatmul.f32.gmra.mxu0 %v1586
        %v1968 = vpop.f32.mrf.mxu0
        %v1969 = vadd.f32 %v1707, %v1968
        %1970 = vmatmul.f32.gmra.mxu0 %v1588
        %v1971 = vpop.f32.mrf.mxu0
        %v1972 = vadd.f32 %v1707, %v1971
        %1973 = vmatmul.f32.gmra.mxu0 %v1590
        %v1974 = vpop.f32.mrf.mxu0
        %v1975 = vadd.f32 %v1707, %v1974
        %1976 = vmatmul.f32.gmra.mxu0 %v1592
        %v1977 = vpop.f32.mrf.mxu0
        %v1978 = vadd.f32 %v1707, %v1977
        %1979 = vmatmul.f32.gmra.mxu0 %v1594
        %v1980 = vpop.f32.mrf.mxu0
        %v1981 = vadd.f32 %v1707, %v1980
        %1982 = vmatmul.f32.gmra.mxu0 %v1596
        %v1983 = vpop.f32.mrf.mxu0
        %v1984 = vadd.f32 %v1707, %v1983
        %1985 = vmatmul.f32.gmra.mxu0 %v1598
        %v1986 = vpop.f32.mrf.mxu0
        %v1987 = vadd.f32 %v1707, %v1986
        %1988 = vmatmul.f32.gmra.mxu0 %v1600
        %v1989 = vpop.f32.mrf.mxu0
        %v1990 = vadd.f32 %v1707, %v1989
        %1991 = vmatmul.f32.gmra.mxu0 %v1602
        %v1992 = vpop.f32.mrf.mxu0
        %v1993 = vadd.f32 %v1707, %v1992
        %1994 = vmatmul.f32.gmra.mxu0 %v1604
        %v1995 = vpop.f32.mrf.mxu0
        %v1996 = vadd.f32 %v1707, %v1995
        %1997 = vmatmul.f32.gmra.mxu0 %v1606
        %v1998 = vpop.f32.mrf.mxu0
        %v1999 = vadd.f32 %v1707, %v1998
        %2000 = vmatmul.f32.gmra.mxu0 %v1608
        %v2001 = vpop.f32.mrf.mxu0
        %v2002 = vadd.f32 %v1707, %v2001
        %2003 = vmatmul.f32.gmra.mxu0 %v1610
        %v2004 = vpop.f32.mrf.mxu0
        %v2005 = vadd.f32 %v1707, %v2004
        %2006 = vmatmul.f32.gmra.mxu0 %v1612
        %v2007 = vpop.f32.mrf.mxu0
        %v2008 = vadd.f32 %v1707, %v2007
        %2009 = vmatmul.f32.gmra.mxu0 %v1614
        %v2010 = vpop.f32.mrf.mxu0
        %v2011 = vadd.f32 %v1707, %v2010
        %2012 = vmatmul.f32.gmra.mxu0 %v1616
        %v2013 = vpop.f32.mrf.mxu0
        %v2014 = vadd.f32 %v1707, %v2013
        %2015 = vmatmul.f32.gmra.mxu0 %v1618
        %v2016 = vpop.f32.mrf.mxu0
        %v2017 = vadd.f32 %v1707, %v2016
        %2018 = vmatmul.f32.gmra.mxu0 %v1620
        %v2019 = vpop.f32.mrf.mxu0
        %v2020 = vadd.f32 %v1707, %v2019
        %2021 = vmatmul.f32.gmra.mxu0 %v1622
        %v2022 = vpop.f32.mrf.mxu0
        %v2023 = vadd.f32 %v1707, %v2022
        %2024 = vmatmul.f32.gmra.mxu0 %v1624
        %v2025 = vpop.f32.mrf.mxu0
        %v2026 = vadd.f32 %v1707, %v2025
        %2027 = vmatmul.f32.gmra.mxu0 %v1626
        %v2028 = vpop.f32.mrf.mxu0
        %v2029 = vadd.f32 %v1707, %v2028
        %2030 = vmatmul.f32.gmra.mxu0 %v1628
        %v2031 = vpop.f32.mrf.mxu0
        %v2032 = vadd.f32 %v1707, %v2031
        %2033 = vmatmul.f32.gmra.mxu0 %v1630
        %v2034 = vpop.f32.mrf.mxu0
        %v2035 = vadd.f32 %v1707, %v2034
        %2036 = vmatmul.f32.gmra.mxu0 %v1632
        %v2037 = vpop.f32.mrf.mxu0
        %v2038 = vadd.f32 %v1707, %v2037
        %2039 = vmatmul.f32.gmra.mxu0 %v1634
        %v2040 = vpop.f32.mrf.mxu0
        %v2041 = vadd.f32 %v1707, %v2040
        %2042 = vmatmul.f32.gmra.mxu0 %v1636
        %v2043 = vpop.f32.mrf.mxu0
        %v2044 = vadd.f32 %v1707, %v2043
        %2045 = vmatmul.f32.gmra.mxu0 %v1638
        %v2046 = vpop.f32.mrf.mxu0
        %v2047 = vadd.f32 %v1707, %v2046
        %2048 = vdwg.mxu0
        %2049 = vmatpush.msra.mxu0 %v1703
        %2050 = vmatpush.msra.mxu0 %v1701
        %2051 = vmatpush.msra.mxu0 %v1699
        %2052 = vmatpush.msra.mxu0 %v1697
        %2053 = vmatpush.msra.mxu0 %v1695
        %2054 = vmatpush.msra.mxu0 %v1693
        %2055 = vmatpush.msra.mxu0 %v1691
        %2056 = vmatpush.msra.mxu0 %v1689
        %2057 = vmatpush.msra.mxu0 %v1687
        %2058 = vmatpush.msra.mxu0 %v1685
        %2059 = vmatpush.msra.mxu0 %v1683
        %2060 = vmatpush.msra.mxu0 %v1681
        %2061 = vmatpush.msra.mxu0 %v1679
        %2062 = vmatpush.msra.mxu0 %v1677
        %2063 = vmatpush.msra.mxu0 %v1675
        %2064 = vmatpush.msra.mxu0 %v1673
        %2065 = vmatmul.f32.gmra.mxu0 %v1577
        %v2066 = vpop.f32.mrf.mxu0
        %v2067 = vadd.f32 %v1954, %v2066
        %2068 = vmatmul.f32.gmra.mxu0 %v1579
        %v2069 = vpop.f32.mrf.mxu0
        %v2070 = vadd.f32 %v1957, %v2069
        %2071 = vmatmul.f32.gmra.mxu0 %v1581
        %v2072 = vpop.f32.mrf.mxu0
        %v2073 = vadd.f32 %v1960, %v2072
        %2074 = vmatmul.f32.gmra.mxu0 %v1583
        %v2075 = vpop.f32.mrf.mxu0
        %v2076 = vadd.f32 %v1963, %v2075
        %2077 = vmatmul.f32.gmra.mxu0 %v1585
        %v2078 = vpop.f32.mrf.mxu0
        %v2079 = vadd.f32 %v1966, %v2078
        %2080 = vmatmul.f32.gmra.mxu0 %v1587
        %v2081 = vpop.f32.mrf.mxu0
        %v2082 = vadd.f32 %v1969, %v2081
        %2083 = vmatmul.f32.gmra.mxu0 %v1589
        %v2084 = vpop.f32.mrf.mxu0
        %v2085 = vadd.f32 %v1972, %v2084
        %2086 = vmatmul.f32.gmra.mxu0 %v1591
        %v2087 = vpop.f32.mrf.mxu0
        %v2088 = vadd.f32 %v1975, %v2087
        %2089 = vmatmul.f32.gmra.mxu0 %v1593
        %v2090 = vpop.f32.mrf.mxu0
        %v2091 = vadd.f32 %v1978, %v2090
        %2092 = vmatmul.f32.gmra.mxu0 %v1595
        %v2093 = vpop.f32.mrf.mxu0
        %v2094 = vadd.f32 %v1981, %v2093
        %2095 = vmatmul.f32.gmra.mxu0 %v1597
        %v2096 = vpop.f32.mrf.mxu0
        %v2097 = vadd.f32 %v1984, %v2096
        %2098 = vmatmul.f32.gmra.mxu0 %v1599
        %v2099 = vpop.f32.mrf.mxu0
        %v2100 = vadd.f32 %v1987, %v2099
        %2101 = vmatmul.f32.gmra.mxu0 %v1601
        %v2102 = vpop.f32.mrf.mxu0
        %v2103 = vadd.f32 %v1990, %v2102
        %2104 = vmatmul.f32.gmra.mxu0 %v1603
        %v2105 = vpop.f32.mrf.mxu0
        %v2106 = vadd.f32 %v1993, %v2105
        %2107 = vmatmul.f32.gmra.mxu0 %v1605
        %v2108 = vpop.f32.mrf.mxu0
        %v2109 = vadd.f32 %v1996, %v2108
        %2110 = vmatmul.f32.gmra.mxu0 %v1607
        %v2111 = vpop.f32.mrf.mxu0
        %v2112 = vadd.f32 %v1999, %v2111
        %2113 = vmatmul.f32.gmra.mxu0 %v1609
        %v2114 = vpop.f32.mrf.mxu0
        %v2115 = vadd.f32 %v2002, %v2114
        %2116 = vmatmul.f32.gmra.mxu0 %v1611
        %v2117 = vpop.f32.mrf.mxu0
        %v2118 = vadd.f32 %v2005, %v2117
        %2119 = vmatmul.f32.gmra.mxu0 %v1613
        %v2120 = vpop.f32.mrf.mxu0
        %v2121 = vadd.f32 %v2008, %v2120
        %2122 = vmatmul.f32.gmra.mxu0 %v1615
        %v2123 = vpop.f32.mrf.mxu0
        %v2124 = vadd.f32 %v2011, %v2123
        %2125 = vmatmul.f32.gmra.mxu0 %v1617
        %v2126 = vpop.f32.mrf.mxu0
        %v2127 = vadd.f32 %v2014, %v2126
        %2128 = vmatmul.f32.gmra.mxu0 %v1619
        %v2129 = vpop.f32.mrf.mxu0
        %v2130 = vadd.f32 %v2017, %v2129
        %2131 = vmatmul.f32.gmra.mxu0 %v1621
        %v2132 = vpop.f32.mrf.mxu0
        %v2133 = vadd.f32 %v2020, %v2132
        %2134 = vmatmul.f32.gmra.mxu0 %v1623
        %v2135 = vpop.f32.mrf.mxu0
        %v2136 = vadd.f32 %v2023, %v2135
        %2137 = vmatmul.f32.gmra.mxu0 %v1625
        %v2138 = vpop.f32.mrf.mxu0
        %v2139 = vadd.f32 %v2026, %v2138
        %2140 = vmatmul.f32.gmra.mxu0 %v1627
        %v2141 = vpop.f32.mrf.mxu0
        %v2142 = vadd.f32 %v2029, %v2141
        %2143 = vmatmul.f32.gmra.mxu0 %v1629
        %v2144 = vpop.f32.mrf.mxu0
        %v2145 = vadd.f32 %v2032, %v2144
        %2146 = vmatmul.f32.gmra.mxu0 %v1631
        %v2147 = vpop.f32.mrf.mxu0
        %v2148 = vadd.f32 %v2035, %v2147
        %2149 = vmatmul.f32.gmra.mxu0 %v1633
        %v2150 = vpop.f32.mrf.mxu0
        %v2151 = vadd.f32 %v2038, %v2150
        %2152 = vmatmul.f32.gmra.mxu0 %v1635
        %v2153 = vpop.f32.mrf.mxu0
        %v2154 = vadd.f32 %v2041, %v2153
        %2155 = vmatmul.f32.gmra.mxu0 %v1637
        %v2156 = vpop.f32.mrf.mxu0
        %v2157 = vadd.f32 %v2044, %v2156
        %2158 = vmatmul.f32.gmra.mxu0 %v1639
        %v2159 = vpop.f32.mrf.mxu0
        %v2160 = vadd.f32 %v2047, %v2159
        %2161 = vdwg.mxu0
        %v2162 = vtanh.pop %v1841
        %v2163 = vtanh.pop %v2067
        %v2164 = vtanh.pop %v1844
        %v2165 = vtanh.pop %v2070
        %v2166 = vtanh.pop %v1847
        %v2167 = vtanh.pop %v2073
        %v2168 = vtanh.pop %v1850
        %v2169 = vtanh.pop %v2076
        %v2170 = vtanh.pop %v1853
        %v2171 = vtanh.pop %v2079
        %v2172 = vtanh.pop %v1856
        %v2173 = vtanh.pop %v2082
        %v2174 = vtanh.pop %v1859
        %v2175 = vtanh.pop %v2085
        %v2176 = vtanh.pop %v1862
        %v2177 = vtanh.pop %v2088
        %v2178 = vtanh.pop %v1865
        %v2179 = vtanh.pop %v2091
        %v2180 = vtanh.pop %v1868
        %v2181 = vtanh.pop %v2094
        %v2182 = vtanh.pop %v1871
        %v2183 = vtanh.pop %v2097
        %v2184 = vtanh.pop %v1874
        %v2185 = vtanh.pop %v2100
        %v2186 = vtanh.pop %v1877
        %v2187 = vtanh.pop %v2103
        %v2188 = vtanh.pop %v1880
        %v2189 = vtanh.pop %v2106
        %v2190 = vtanh.pop %v1883
        %v2191 = vtanh.pop %v2109
        %v2192 = vtanh.pop %v1886
        %v2193 = vtanh.pop %v2112
        %v2194 = vtanh.pop %v1889
        %v2195 = vtanh.pop %v2115
        %v2196 = vtanh.pop %v1892
        %v2197 = vtanh.pop %v2118
        %v2198 = vtanh.pop %v1895
        %v2199 = vtanh.pop %v2121
        %v2200 = vtanh.pop %v1898
        %v2201 = vtanh.pop %v2124
        %v2202 = vtanh.pop %v1901
        %v2203 = vtanh.pop %v2127
        %v2204 = vtanh.pop %v1904
        %v2205 = vtanh.pop %v2130
        %v2206 = vtanh.pop %v1907
        %v2207 = vtanh.pop %v2133
        %v2208 = vtanh.pop %v1910
        %v2209 = vtanh.pop %v2136
        %v2210 = vtanh.pop %v1913
        %v2211 = vtanh.pop %v2139
        %v2212 = vtanh.pop %v1916
        %v2213 = vtanh.pop %v2142
        %v2214 = vtanh.pop %v1919
        %v2215 = vtanh.pop %v2145
        %v2216 = vtanh.pop %v1922
        %v2217 = vtanh.pop %v2148
        %v2218 = vtanh.pop %v1925
        %v2219 = vtanh.pop %v2151
        %v2220 = vtanh.pop %v1928
        %v2221 = vtanh.pop %v2154
        %v2222 = vtanh.pop %v1931
        %v2223 = vtanh.pop %v2157
        %v2224 = vtanh.pop %v1934
        %v2225 = vtanh.pop %v2160
        %v2226 = vadd.f32 %v2162, %v1576
        %v2227 = vadd.f32 %v2163, %v1577
        %v2228 = vadd.f32 %v2164, %v1578
        %v2229 = vadd.f32 %v2165, %v1579
        %v2230 = vadd.f32 %v2166, %v1580
        %v2231 = vadd.f32 %v2167, %v1581
        %v2232 = vadd.f32 %v2168, %v1582
        %v2233 = vadd.f32 %v2169, %v1583
        %v2234 = vadd.f32 %v2170, %v1584
        %v2235 = vadd.f32 %v2171, %v1585
        %v2236 = vadd.f32 %v2172, %v1586
        %v2237 = vadd.f32 %v2173, %v1587
        %v2238 = vadd.f32 %v2174, %v1588
        %v2239 = vadd.f32 %v2175, %v1589
        %v2240 = vadd.f32 %v2176, %v1590
        %v2241 = vadd.f32 %v2177, %v1591
        %v2242 = vadd.f32 %v2178, %v1592
        %v2243 = vadd.f32 %v2179, %v1593
        %v2244 = vadd.f32 %v2180, %v1594
        %v2245 = vadd.f32 %v2181, %v1595
        %v2246 = vadd.f32 %v2182, %v1596
        %v2247 = vadd.f32 %v2183, %v1597
        %v2248 = vadd.f32 %v2184, %v1598
        %v2249 = vadd.f32 %v2185, %v1599
        %v2250 = vadd.f32 %v2186, %v1600
        %v2251 = vadd.f32 %v2187, %v1601
        %v2252 = vadd.f32 %v2188, %v1602
        %v2253 = vadd.f32 %v2189, %v1603
        %v2254 = vadd.f32 %v2190, %v1604
        %v2255 = vadd.f32 %v2191, %v1605
        %v2256 = vadd.f32 %v2192, %v1606
        %v2257 = vadd.f32 %v2193, %v1607
        %v2258 = vadd.f32 %v2194, %v1608
        %v2259 = vadd.f32 %v2195, %v1609
        %v2260 = vadd.f32 %v2196, %v1610
        %v2261 = vadd.f32 %v2197, %v1611
        %v2262 = vadd.f32 %v2198, %v1612
        %v2263 = vadd.f32 %v2199, %v1613
        %v2264 = vadd.f32 %v2200, %v1614
        %v2265 = vadd.f32 %v2201, %v1615
        %v2266 = vadd.f32 %v2202, %v1616
        %v2267 = vadd.f32 %v2203, %v1617
        %v2268 = vadd.f32 %v2204, %v1618
        %v2269 = vadd.f32 %v2205, %v1619
        %v2270 = vadd.f32 %v2206, %v1620
        %v2271 = vadd.f32 %v2207, %v1621
        %v2272 = vadd.f32 %v2208, %v1622
        %v2273 = vadd.f32 %v2209, %v1623
        %v2274 = vadd.f32 %v2210, %v1624
        %v2275 = vadd.f32 %v2211, %v1625
        %v2276 = vadd.f32 %v2212, %v1626
        %v2277 = vadd.f32 %v2213, %v1627
        %v2278 = vadd.f32 %v2214, %v1628
        %v2279 = vadd.f32 %v2215, %v1629
        %v2280 = vadd.f32 %v2216, %v1630
        %v2281 = vadd.f32 %v2217, %v1631
        %v2282 = vadd.f32 %v2218, %v1632
        %v2283 = vadd.f32 %v2219, %v1633
        %v2284 = vadd.f32 %v2220, %v1634
        %v2285 = vadd.f32 %v2221, %v1635
        %v2286 = vadd.f32 %v2222, %v1636
        %v2287 = vadd.f32 %v2223, %v1637
        %v2288 = vadd.f32 %v2224, %v1638
        %v2289 = vadd.f32 %v2225, %v1639
        %v2290 = vld [vmem:[%s533] sm:$0x3]
        %v2291 = vld [vmem:[%s538] sm:$0x1]
        %2293 = vset.pattern.permute.xlu0 0
        %2294 = vperm.xlu0 %2293, %v2291
        %v2295 = vpop.permute.xlu0 %2294
        %v2297 = vperm.slane %v2295, 0
        %v2299 = vperm.slane %v2290, 0
        %v2300 = vperm.slane %v2290, 1
        %2303 = vmatpush.xpose.msra.mxu0 %v2256
        %2304 = vmatpush.xpose.msra.mxu0 %v2254
        %2305 = vmatpush.xpose.msra.mxu0 %v2252
        %2306 = vmatpush.xpose.msra.mxu0 %v2250
        %2307 = vmatpush.xpose.msra.mxu0 %v2248
        %2308 = vmatpush.xpose.msra.mxu0 %v2246
        %2309 = vmatpush.xpose.msra.mxu0 %v2244
        %2310 = vmatpush.xpose.msra.mxu0 %v2242
        %2311 = vmatpush.xpose.msra.mxu0 %v2240
        %2312 = vmatpush.xpose.msra.mxu0 %v2238
        %2313 = vmatpush.xpose.msra.mxu0 %v2236
        %2314 = vmatpush.xpose.msra.mxu0 %v2234
        %2315 = vmatpush.xpose.msra.mxu0 %v2232
        %2316 = vmatpush.xpose.msra.mxu0 %v2230
        %2317 = vmatpush.xpose.msra.mxu0 %v2228
        %2318 = vmatpush.xpose.msra.mxu0 %v2226
        %2319 = vmatmul.f32.gmra.mxu0 %v2299
        %v2320 = vpop.f32.mrf.mxu0
        %v2321 = vadd.f32 %v2297, %v2320
        %2322 = vdwg.mxu0
        %2323 = vmatpush.xpose.msra.mxu0 %v2257
        %2324 = vmatpush.xpose.msra.mxu0 %v2255
        %2325 = vmatpush.xpose.msra.mxu0 %v2253
        %2326 = vmatpush.xpose.msra.mxu0 %v2251
        %2327 = vmatpush.xpose.msra.mxu0 %v2249
        %2328 = vmatpush.xpose.msra.mxu0 %v2247
        %2329 = vmatpush.xpose.msra.mxu0 %v2245
        %2330 = vmatpush.xpose.msra.mxu0 %v2243
        %2331 = vmatpush.xpose.msra.mxu0 %v2241
        %2332 = vmatpush.xpose.msra.mxu0 %v2239
        %2333 = vmatpush.xpose.msra.mxu0 %v2237
        %2334 = vmatpush.xpose.msra.mxu0 %v2235
        %2335 = vmatpush.xpose.msra.mxu0 %v2233
        %2336 = vmatpush.xpose.msra.mxu0 %v2231
        %2337 = vmatpush.xpose.msra.mxu0 %v2229
        %2338 = vmatpush.xpose.msra.mxu0 %v2227
        %2339 = vmatmul.f32.gmra.mxu0 %v2300
        %v2340 = vpop.f32.mrf.mxu0
        %v2341 = vadd.f32 %v2321, %v2340
        %2342 = vdwg.mxu0
        %2343 = vmatpush.xpose.msra.mxu0 %v2288
        %2344 = vmatpush.xpose.msra.mxu0 %v2286
        %2345 = vmatpush.xpose.msra.mxu0 %v2284
        %2346 = vmatpush.xpose.msra.mxu0 %v2282
        %2347 = vmatpush.xpose.msra.mxu0 %v2280
        %2348 = vmatpush.xpose.msra.mxu0 %v2278
        %2349 = vmatpush.xpose.msra.mxu0 %v2276
        %2350 = vmatpush.xpose.msra.mxu0 %v2274
        %2351 = vmatpush.xpose.msra.mxu0 %v2272
        %2352 = vmatpush.xpose.msra.mxu0 %v2270
        %2353 = vmatpush.xpose.msra.mxu0 %v2268
        %2354 = vmatpush.xpose.msra.mxu0 %v2266
        %2355 = vmatpush.xpose.msra.mxu0 %v2264
        %2356 = vmatpush.xpose.msra.mxu0 %v2262
        %2357 = vmatpush.xpose.msra.mxu0 %v2260
        %2358 = vmatpush.xpose.msra.mxu0 %v2258
        %2359 = vmatmul.f32.gmra.mxu0 %v2299
        %v2360 = vpop.f32.mrf.mxu0
        %v2361 = vadd.f32 %v2297, %v2360
        %2362 = vdwg.mxu0
        %2363 = vmatpush.xpose.msra.mxu0 %v2289
        %2364 = vmatpush.xpose.msra.mxu0 %v2287
        %2365 = vmatpush.xpose.msra.mxu0 %v2285
        %2366 = vmatpush.xpose.msra.mxu0 %v2283
        %2367 = vmatpush.xpose.msra.mxu0 %v2281
        %2368 = vmatpush.xpose.msra.mxu0 %v2279
        %2369 = vmatpush.xpose.msra.mxu0 %v2277
        %2370 = vmatpush.xpose.msra.mxu0 %v2275
        %2371 = vmatpush.xpose.msra.mxu0 %v2273
        %2372 = vmatpush.xpose.msra.mxu0 %v2271
        %2373 = vmatpush.xpose.msra.mxu0 %v2269
        %2374 = vmatpush.xpose.msra.mxu0 %v2267
        %2375 = vmatpush.xpose.msra.mxu0 %v2265
        %2376 = vmatpush.xpose.msra.mxu0 %v2263
        %2377 = vmatpush.xpose.msra.mxu0 %v2261
        %2378 = vmatpush.xpose.msra.mxu0 %v2259
        %2379 = vmatmul.f32.gmra.mxu0 %v2300
        %v2380 = vpop.f32.mrf.mxu0
        %v2381 = vadd.f32 %v2361, %v2380
        %2382 = vdwg.mxu0
        %v2385 = vrot.slane %v2381, 7
        %vm2386 = vcmask 1040384
        %v2387 = vsel %vm2386, %v2341, %v2385
        %v2389 = vlaneseq
        %vm2390 = vcmp.ge.s32.totalorder %v2389, 0
        %vm2391 = vcmp.lt.s32.totalorder %v2389, 256
        %vm2392 = vmand %vm2390, %vm2391
        %2393 = vst.msk [vmem:[%s543] sm:$0x3] %vm2392, %v2387
      $region60: #{fitting_forward.1} parent=55 // pred_fallthru
        _
      %p2394 = scmp.eq.s32.totalorder %s544, 0
      // Predicated region
      $region61: #{fitting_forward.1} parent=55 // pred_check
        %p2395 = pneg %p2394
      $region62: #{fitting_forward.1} parent=55 // pred_check_branch
        %2397 = sbr.rel (%p2395) target = $region64
      $region63: #{fitting_forward.1} parent=55 // pred_region
        %v2398 = vlaneseq
        %vm2399 = vcmp.ge.s32.totalorder %v2398, 0
        %vm2400 = vcmp.lt.s32.totalorder %v2398, 256
        %vm2401 = vmand %vm2399, %vm2400
        %2402 = vst.msk [vmem:[%s543] sm:$0x3] %vm2401, 0.0
      $region64: #{fitting_forward.1} parent=55 // pred_fallthru
        _
      %p2403 = scmp.lt.s32.totalorder %s35, 2
      %s2404 = scalar_select %p2403, %s35, 2
      %s2405 = smul.addr %s2404, 2
      %s2406 = scalar_lea.vmem %s11, %s2405
      // Predicated region
      $region65: #{fitting_forward.1} parent=55 // pred_check
        %p2407 = pneg %p303
      $region66: #{fitting_forward.1} parent=55 // pred_check_branch
        %2409 = sbr.rel (%p2407) target = $region68
      $region67: #{fitting_forward.1} parent=55 // pred_region
        _
      $region68: #{fitting_forward.1} parent=55 // pred_fallthru
        _
    $region56: #{fitting_forward.1} parent=5 // pred_fallthru
      _
    %p2410 = scmp.le.s32.totalorder 2, %s30
    // Predicated region
    $region69: #{fitting_forward.1} parent=5 // pred_check
      %p2411 = pneg %p2410
    $region70: #{fitting_forward.1} parent=5 // pred_check_branch
      %2413 = sbr.rel (%p2411) target = $region72
    $region71: #{fitting_forward.1} parent=5 // pred_region
      %s2414 = ssub.s32 %s30, 2
      // Predicated region
      $region73: #{fitting_forward.1} parent=71 // pred_check
        %p2415 = pneg %p309
      $region74: #{fitting_forward.1} parent=71 // pred_check_branch
        %2417 = sbr.rel (%p2415) target = $region76
      $region75: #{fitting_forward.1} parent=71 // pred_region
        %p2418 = scmp.lt.s32.totalorder %s36, 2
        %s2419 = scalar_select %p2418, %s36, 2
        %s2420 = smul.addr %s2419, 2
        %s2421 = scalar_lea.vmem %s11, %s2420
      $region76: #{fitting_forward.1} parent=71 // pred_fallthru
        _
    $region72: #{fitting_forward.1} parent=5 // pred_fallthru
      _
  $region6: #{fitting_forward.1} parent=0 // loop_footer
    %s34 = sadd.s32 1, %s30
  $region7: #{fitting_forward.1} parent=0 // loop_footer_branch
    %29 = sbr.rel target = $region3
  $region8: #{fitting_forward.1} parent=0 // loop_exit
    _

</llo_original>
